<compile_context>
chip_gen: v7x
topology: tpu7x:2x2x1
jax: 0.10.0
libtpu: 0.0.40
codegen_flags: <defaults>
</compile_context>

<pallas_src>
import jax
import jax.numpy as jnp
import numpy as np
from jax import lax
from jax.experimental import pallas as pl
from jax.experimental.pallas import tpu as pltpu

PROTOTYPE_DIM = 10  # hard-coded in DsFunction1.forward
CLASS_DIM = 2       # hard-coded in DsFunction1.forward


def ds1_kernel(p_ref, x_ref, out_ref):
    """One (batch, row-tile) grid step.

    p_ref:   (K, C+3) SMEM per-prototype scalars:
               [:, 0:C]  gamma_k^2 * W[k]                      (coef of x_c)
               [:, C]    0.5 * gamma_k^2                       (coef of ||x||^2)
               [:, C+1]  log(alpha'_k) - 0.5*gamma_k^2*||W_k||^2  (bias)
               [:, C+2]  U[k, 1]                               (class-1 membership)
    x_ref:   (C, TR, LANES) VMEM input block (spatial tile = rows x lanes)
    out_ref: (3, TR, LANES) VMEM output block (m0, m1, m_theta), normalized
    """
    C, TR, LANES = x_ref.shape
    K = PROTOTYPE_DIM

    # Hoist all SMEM scalar reads out of the row loop (loop-invariant sregs).
    cw = [[p_ref[k, c] for c in range(C)] for k in range(K)]
    cq = [p_ref[k, C] for k in range(K)]
    cb = [p_ref[k, C + 1] for k in range(K)]
    u1 = [p_ref[k, C + 2] for k in range(K)]

    rc = 8 if TR % 8 == 0 else TR        # full-sublane row chunk -> dense vregs
    n_chunks = TR // rc

    def row_chunk(r0):
        xs = [x_ref[c, pl.ds(r0, rc), :] for c in range(C)]   # C x (rc, LANES)

        # ||x||^2, shared across prototypes.
        q = xs[0] * xs[0]
        for c in range(1, C):
            q = q + xs[c] * xs[c]

        # Commonality chains: Q0=prod(1-u1*s), Q1=prod(1-u0*s), Qt=prod(1-s).
        q0 = q1 = qt = None
        for k in range(K):
            # exponent = log(a') - 0.5*g^2*||x-w||^2 (expanded form, all dense)
            e = cb[k] - cq[k] * q
            for c in range(C):
                e = e + cw[k][c] * xs[c]
            s = jnp.exp(e)               # EUP slot
            a = u1[k] * s                # u1*s
            ft = 1.0 - s                 # 1 - s
            f0 = 1.0 - a                 # 1 - u1*s  (= u0*s + 1 - s)
            f1 = ft + a                  # 1 - u0*s  (u0 = 1 - u1)
            if k == 0:
                q0, q1, qt = f0, f1, ft
            else:
                q0 = q0 * f0
                q1 = q1 * f1
                qt = qt * ft

        m0 = q0 - qt
        m1 = q1 - qt
        inv = 1.0 / (q0 + m1)            # denom = Q0 + Q1 - Qt > 0 (exact recip)
        # Direct row stores -- no concatenate epilogue.
        out_ref[0, pl.ds(r0, rc), :] = m0 * inv
        out_ref[1, pl.ds(r0, rc), :] = m1 * inv
        out_ref[2, pl.ds(r0, rc), :] = qt * inv

    if n_chunks == 1:
        row_chunk(0)
    else:
        def body(j, carry):
            row_chunk(pl.multiple_of(j * rc, rc))
            return carry
        lax.fori_loop(0, n_chunks, body, 0)


def _spatial_layout(hwd):
    """Pick (lanes, padded_hwd): prefer >=8 rows (sublane-dense), largest lanes."""
    for lanes in (512, 256, 128):
        if hwd % lanes == 0 and hwd // lanes >= 8:
            return lanes, hwd
    for lanes in (512, 256, 128):
        if hwd % lanes == 0:
            return lanes, hwd
    padded = -(-hwd // 128) * 128
    return 128, padded


def ds1_forward(x, W, BETA, alpha, gamma, *, row_tile=256):
    """Pallas forward of DsFunction1.

    x:     (B, C, H, W, D) float32
    W:     (PROTOTYPE_DIM, C)
    BETA:  (PROTOTYPE_DIM, CLASS_DIM)
    alpha: (PROTOTYPE_DIM, 1)
    gamma: (PROTOTYPE_DIM, 1)
    returns (B, CLASS_DIM+1, H, W, D)
    """
    B, C, H, Wd, D = x.shape
    hwd = H * Wd * D

    # ---- per-prototype scalar glue (tiny, plain JAX) ----
    BETA2 = BETA * BETA
    U = (BETA2 / jnp.sum(BETA2, axis=1, keepdims=True)).astype(jnp.float32)  # (K,2)
    alphap = 0.99 / (1.0 + jnp.exp(-alpha))                                  # (K,1)
    g2 = (gamma * gamma).astype(jnp.float32)                                 # (K,1)
    g2h = 0.5 * g2                                                           # (K,1)
    cw = (g2 * W).astype(jnp.float32)                                        # (K,C)
    wsq = jnp.sum(W * W, axis=1, keepdims=True)                              # (K,1)
    cb = (jnp.log(alphap) - g2h * wsq).astype(jnp.float32)                   # (K,1)
    params = jnp.concatenate([cw, g2h, cb, U[:, 1:2]], axis=1)               # (K,C+3)
    params = params.astype(jnp.float32)

    # ---- layout: (B,C,H,W,D) -> (B,C,R,LANES); free reshape when aligned ----
    lanes, hwd_p = _spatial_layout(hwd)
    x3 = x.reshape(B, C, hwd).astype(jnp.float32)
    if hwd_p != hwd:
        x3 = jnp.pad(x3, ((0, 0), (0, 0), (0, hwd_p - hwd)))
    R = hwd_p // lanes
    x4 = x3.reshape(B, C, R, lanes)

    if R >= 8:
        tr = max(8, (min(row_tile, R) // 8) * 8)   # multiple of 8 rows
    else:
        tr = R                                     # tiny inputs: partial density
    grid_r = pl.cdiv(R, tr)                        # ragged last tile -> masked stores

    out = pl.pallas_call(
        ds1_kernel,
        out_shape=jax.ShapeDtypeStruct((B, CLASS_DIM + 1, R, lanes), jnp.float32),
        grid_spec=pltpu.PrefetchScalarGridSpec(
            num_scalar_prefetch=0,
            grid=(B, grid_r),
            in_specs=[
                pl.BlockSpec(memory_space=pltpu.MemorySpace.SMEM),
                pl.BlockSpec((None, C, tr, lanes), lambda b, i: (b, 0, i, 0)),
            ],
            out_specs=pl.BlockSpec((None, CLASS_DIM + 1, tr, lanes),
                                   lambda b, i: (b, 0, i, 0)),
        ),
        # Both grid axes independent -> megacore sharding on v7x (2 TCs).
        compiler_params=pltpu.CompilerParams(
            dimension_semantics=("parallel", "parallel")),
    )(params, x4)

    out = out.reshape(B, CLASS_DIM + 1, hwd_p)
    if hwd_p != hwd:
        out = out[:, :, :hwd]
    return out.reshape(B, CLASS_DIM + 1, H, Wd, D)
    # TODO(synk): backward pass (custom autograd in DsFunction1) not implemented; forward only.


def ds1_reference(x, W, BETA, alpha, gamma):
    """Pure-JAX port of DsFunction1.forward for verification."""
    B, C, H, Wd, D = x.shape
    BETA2 = BETA * BETA
    beta2 = jnp.sum(BETA2, axis=1, keepdims=True)
    U = BETA2 / beta2
    alphap = 0.99 / (1.0 + jnp.exp(-alpha))
    xp = jnp.transpose(x, (1, 0, 2, 3, 4))  # (C,B,H,W,D)
    mk = jnp.concatenate(
        [jnp.zeros((CLASS_DIM, B, H, Wd, D), jnp.float32),
         jnp.ones((1, B, H, Wd, D), jnp.float32)], axis=0)
    for k in range(PROTOTYPE_DIM):
        temp = xp - W[k][:, None, None, None, None]
        dk = 0.5 * jnp.sum(temp * temp, axis=0)
        sk = alphap[k, 0] * jnp.exp(-(gamma[k, 0] ** 2) * dk)
        m = jnp.concatenate(
            [U[k][:, None, None, None, None] * sk[None], (1.0 - sk)[None]], axis=0)
        t2 = mk[:CLASS_DIM] * (m[:CLASS_DIM] + m[CLASS_DIM][None])
        t3 = m[:CLASS_DIM] * mk[CLASS_DIM][None]
        t4 = (mk[CLASS_DIM] * m[CLASS_DIM])[None]
        mk = jnp.concatenate([t2 + t3, t4], axis=0)
    K = mk.sum(0)
    return jnp.transpose(mk / K[None], (1, 0, 2, 3, 4))


if __name__ == "__main__":
    # Small shapes consistent with the module: 5-D input (B, C, H, W, D).
    # HWD = 4096 -> lanes=512, 8 rows (fully sublane-dense vregs), grid=(2, 1).
    B, C, H, Wd, D = 2, 4, 16, 16, 16

    key = jax.random.PRNGKey(0)
    kx, kw, kb = jax.random.split(key, 3)
    x = jax.random.normal(kx, (B, C, H, Wd, D), dtype=jnp.float32)

    # Deterministic parameter init mirroring Ds1.reset_parameters():
    #   W ~ normal, BETA ~ normal, gamma = 0.1, alpha = 0
    W = jax.random.normal(kw, (PROTOTYPE_DIM, C), dtype=jnp.float32)
    BETA = jax.random.normal(kb, (PROTOTYPE_DIM, CLASS_DIM), dtype=jnp.float32)
    gamma = jnp.full((PROTOTYPE_DIM, 1), 0.1, dtype=jnp.float32)
    alpha = jnp.zeros((PROTOTYPE_DIM, 1), dtype=jnp.float32)

    fwd = jax.jit(ds1_forward)
    out = jax.block_until_ready(fwd(x, W, BETA, alpha, gamma))

    ref = ds1_reference(x, W, BETA, alpha, gamma)
    # Exact f32 arithmetic everywhere (no approx reciprocal, no matmul passes):
    # expected agreement ~1e-6; tolerance keeps generous headroom for HW exp ULPs.
    np.testing.assert_allclose(np.asarray(out), np.asarray(ref), rtol=1e-3, atol=1e-4)
    assert out.shape == (B, CLASS_DIM + 1, H, Wd, D)

    print("KERNEL_OK")
</pallas_src>

<mosaic_0001>
module attributes {stable_mosaic.version = 11 : i64} {
  func.func @ds1_kernel(%arg0: i32, %arg1: i32, %arg2: memref<10x7xf32, #tpu.memory_space<smem>>, %arg3: memref<1x4x8x512xf32, #tpu.memory_space<vmem>>, %arg4: memref<1x3x8x512xf32, #tpu.memory_space<vmem>>) attributes {dimension_semantics = [#tpu.dimension_semantics<parallel>, #tpu.dimension_semantics<parallel>], iteration_bounds = array<i64: 2, 1>, scalar_prefetch = 0 : i64, scratch_operands = 0 : i64, tpu.core_type = #tpu.core_type<tc>, window_params = [{transform_indices = @transform_0, window_bounds = array<i64: 10, 7>}, {transform_indices = @transform_1, window_bounds = array<i64: 1, 4, 8, 512>}, {transform_indices = @transform_2, window_bounds = array<i64: 1, 3, 8, 512>}]} {
    %c0 = arith.constant 0 : index
    %c0_0 = arith.constant 0 : index
    %0 = memref.load %arg2[%c0, %c0_0] : memref<10x7xf32, #tpu.memory_space<smem>>
    %c0_1 = arith.constant 0 : index
    %c1 = arith.constant 1 : index
    %1 = memref.load %arg2[%c0_1, %c1] : memref<10x7xf32, #tpu.memory_space<smem>>
    %c0_2 = arith.constant 0 : index
    %c2 = arith.constant 2 : index
    %2 = memref.load %arg2[%c0_2, %c2] : memref<10x7xf32, #tpu.memory_space<smem>>
    %c0_3 = arith.constant 0 : index
    %c3 = arith.constant 3 : index
    %3 = memref.load %arg2[%c0_3, %c3] : memref<10x7xf32, #tpu.memory_space<smem>>
    %c1_4 = arith.constant 1 : index
    %c0_5 = arith.constant 0 : index
    %4 = memref.load %arg2[%c1_4, %c0_5] : memref<10x7xf32, #tpu.memory_space<smem>>
    %c1_6 = arith.constant 1 : index
    %c1_7 = arith.constant 1 : index
    %5 = memref.load %arg2[%c1_6, %c1_7] : memref<10x7xf32, #tpu.memory_space<smem>>
    %c1_8 = arith.constant 1 : index
    %c2_9 = arith.constant 2 : index
    %6 = memref.load %arg2[%c1_8, %c2_9] : memref<10x7xf32, #tpu.memory_space<smem>>
    %c1_10 = arith.constant 1 : index
    %c3_11 = arith.constant 3 : index
    %7 = memref.load %arg2[%c1_10, %c3_11] : memref<10x7xf32, #tpu.memory_space<smem>>
    %c2_12 = arith.constant 2 : index
    %c0_13 = arith.constant 0 : index
    %8 = memref.load %arg2[%c2_12, %c0_13] : memref<10x7xf32, #tpu.memory_space<smem>>
    %c2_14 = arith.constant 2 : index
    %c1_15 = arith.constant 1 : index
    %9 = memref.load %arg2[%c2_14, %c1_15] : memref<10x7xf32, #tpu.memory_space<smem>>
    %c2_16 = arith.constant 2 : index
    %c2_17 = arith.constant 2 : index
    %10 = memref.load %arg2[%c2_16, %c2_17] : memref<10x7xf32, #tpu.memory_space<smem>>
    %c2_18 = arith.constant 2 : index
    %c3_19 = arith.constant 3 : index
    %11 = memref.load %arg2[%c2_18, %c3_19] : memref<10x7xf32, #tpu.memory_space<smem>>
    %c3_20 = arith.constant 3 : index
    %c0_21 = arith.constant 0 : index
    %12 = memref.load %arg2[%c3_20, %c0_21] : memref<10x7xf32, #tpu.memory_space<smem>>
    %c3_22 = arith.constant 3 : index
    %c1_23 = arith.constant 1 : index
    %13 = memref.load %arg2[%c3_22, %c1_23] : memref<10x7xf32, #tpu.memory_space<smem>>
    %c3_24 = arith.constant 3 : index
    %c2_25 = arith.constant 2 : index
    %14 = memref.load %arg2[%c3_24, %c2_25] : memref<10x7xf32, #tpu.memory_space<smem>>
    %c3_26 = arith.constant 3 : index
    %c3_27 = arith.constant 3 : index
    %15 = memref.load %arg2[%c3_26, %c3_27] : memref<10x7xf32, #tpu.memory_space<smem>>
    %c4 = arith.constant 4 : index
    %c0_28 = arith.constant 0 : index
    %16 = memref.load %arg2[%c4, %c0_28] : memref<10x7xf32, #tpu.memory_space<smem>>
    %c4_29 = arith.constant 4 : index
    %c1_30 = arith.constant 1 : index
    %17 = memref.load %arg2[%c4_29, %c1_30] : memref<10x7xf32, #tpu.memory_space<smem>>
    %c4_31 = arith.constant 4 : index
    %c2_32 = arith.constant 2 : index
    %18 = memref.load %arg2[%c4_31, %c2_32] : memref<10x7xf32, #tpu.memory_space<smem>>
    %c4_33 = arith.constant 4 : index
    %c3_34 = arith.constant 3 : index
    %19 = memref.load %arg2[%c4_33, %c3_34] : memref<10x7xf32, #tpu.memory_space<smem>>
    %c5 = arith.constant 5 : index
    %c0_35 = arith.constant 0 : index
    %20 = memref.load %arg2[%c5, %c0_35] : memref<10x7xf32, #tpu.memory_space<smem>>
    %c5_36 = arith.constant 5 : index
    %c1_37 = arith.constant 1 : index
    %21 = memref.load %arg2[%c5_36, %c1_37] : memref<10x7xf32, #tpu.memory_space<smem>>
    %c5_38 = arith.constant 5 : index
    %c2_39 = arith.constant 2 : index
    %22 = memref.load %arg2[%c5_38, %c2_39] : memref<10x7xf32, #tpu.memory_space<smem>>
    %c5_40 = arith.constant 5 : index
    %c3_41 = arith.constant 3 : index
    %23 = memref.load %arg2[%c5_40, %c3_41] : memref<10x7xf32, #tpu.memory_space<smem>>
    %c6 = arith.constant 6 : index
    %c0_42 = arith.constant 0 : index
    %24 = memref.load %arg2[%c6, %c0_42] : memref<10x7xf32, #tpu.memory_space<smem>>
    %c6_43 = arith.constant 6 : index
    %c1_44 = arith.constant 1 : index
    %25 = memref.load %arg2[%c6_43, %c1_44] : memref<10x7xf32, #tpu.memory_space<smem>>
    %c6_45 = arith.constant 6 : index
    %c2_46 = arith.constant 2 : index
    %26 = memref.load %arg2[%c6_45, %c2_46] : memref<10x7xf32, #tpu.memory_space<smem>>
    %c6_47 = arith.constant 6 : index
    %c3_48 = arith.constant 3 : index
    %27 = memref.load %arg2[%c6_47, %c3_48] : memref<10x7xf32, #tpu.memory_space<smem>>
    %c7 = arith.constant 7 : index
    %c0_49 = arith.constant 0 : index
    %28 = memref.load %arg2[%c7, %c0_49] : memref<10x7xf32, #tpu.memory_space<smem>>
    %c7_50 = arith.constant 7 : index
    %c1_51 = arith.constant 1 : index
    %29 = memref.load %arg2[%c7_50, %c1_51] : memref<10x7xf32, #tpu.memory_space<smem>>
    %c7_52 = arith.constant 7 : index
    %c2_53 = arith.constant 2 : index
    %30 = memref.load %arg2[%c7_52, %c2_53] : memref<10x7xf32, #tpu.memory_space<smem>>
    %c7_54 = arith.constant 7 : index
    %c3_55 = arith.constant 3 : index
    %31 = memref.load %arg2[%c7_54, %c3_55] : memref<10x7xf32, #tpu.memory_space<smem>>
    %c8 = arith.constant 8 : index
    %c0_56 = arith.constant 0 : index
    %32 = memref.load %arg2[%c8, %c0_56] : memref<10x7xf32, #tpu.memory_space<smem>>
    %c8_57 = arith.constant 8 : index
    %c1_58 = arith.constant 1 : index
    %33 = memref.load %arg2[%c8_57, %c1_58] : memref<10x7xf32, #tpu.memory_space<smem>>
    %c8_59 = arith.constant 8 : index
    %c2_60 = arith.constant 2 : index
    %34 = memref.load %arg2[%c8_59, %c2_60] : memref<10x7xf32, #tpu.memory_space<smem>>
    %c8_61 = arith.constant 8 : index
    %c3_62 = arith.constant 3 : index
    %35 = memref.load %arg2[%c8_61, %c3_62] : memref<10x7xf32, #tpu.memory_space<smem>>
    %c9 = arith.constant 9 : index
    %c0_63 = arith.constant 0 : index
    %36 = memref.load %arg2[%c9, %c0_63] : memref<10x7xf32, #tpu.memory_space<smem>>
    %c9_64 = arith.constant 9 : index
    %c1_65 = arith.constant 1 : index
    %37 = memref.load %arg2[%c9_64, %c1_65] : memref<10x7xf32, #tpu.memory_space<smem>>
    %c9_66 = arith.constant 9 : index
    %c2_67 = arith.constant 2 : index
    %38 = memref.load %arg2[%c9_66, %c2_67] : memref<10x7xf32, #tpu.memory_space<smem>>
    %c9_68 = arith.constant 9 : index
    %c3_69 = arith.constant 3 : index
    %39 = memref.load %arg2[%c9_68, %c3_69] : memref<10x7xf32, #tpu.memory_space<smem>>
    %c0_70 = arith.constant 0 : index
    %c4_71 = arith.constant 4 : index
    %40 = memref.load %arg2[%c0_70, %c4_71] : memref<10x7xf32, #tpu.memory_space<smem>>
    %c1_72 = arith.constant 1 : index
    %c4_73 = arith.constant 4 : index
    %41 = memref.load %arg2[%c1_72, %c4_73] : memref<10x7xf32, #tpu.memory_space<smem>>
    %c2_74 = arith.constant 2 : index
    %c4_75 = arith.constant 4 : index
    %42 = memref.load %arg2[%c2_74, %c4_75] : memref<10x7xf32, #tpu.memory_space<smem>>
    %c3_76 = arith.constant 3 : index
    %c4_77 = arith.constant 4 : index
    %43 = memref.load %arg2[%c3_76, %c4_77] : memref<10x7xf32, #tpu.memory_space<smem>>
    %c4_78 = arith.constant 4 : index
    %c4_79 = arith.constant 4 : index
    %44 = memref.load %arg2[%c4_78, %c4_79] : memref<10x7xf32, #tpu.memory_space<smem>>
    %c5_80 = arith.constant 5 : index
    %c4_81 = arith.constant 4 : index
    %45 = memref.load %arg2[%c5_80, %c4_81] : memref<10x7xf32, #tpu.memory_space<smem>>
    %c6_82 = arith.constant 6 : index
    %c4_83 = arith.constant 4 : index
    %46 = memref.load %arg2[%c6_82, %c4_83] : memref<10x7xf32, #tpu.memory_space<smem>>
    %c7_84 = arith.constant 7 : index
    %c4_85 = arith.constant 4 : index
    %47 = memref.load %arg2[%c7_84, %c4_85] : memref<10x7xf32, #tpu.memory_space<smem>>
    %c8_86 = arith.constant 8 : index
    %c4_87 = arith.constant 4 : index
    %48 = memref.load %arg2[%c8_86, %c4_87] : memref<10x7xf32, #tpu.memory_space<smem>>
    %c9_88 = arith.constant 9 : index
    %c4_89 = arith.constant 4 : index
    %49 = memref.load %arg2[%c9_88, %c4_89] : memref<10x7xf32, #tpu.memory_space<smem>>
    %c0_90 = arith.constant 0 : index
    %c5_91 = arith.constant 5 : index
    %50 = memref.load %arg2[%c0_90, %c5_91] : memref<10x7xf32, #tpu.memory_space<smem>>
    %c1_92 = arith.constant 1 : index
    %c5_93 = arith.constant 5 : index
    %51 = memref.load %arg2[%c1_92, %c5_93] : memref<10x7xf32, #tpu.memory_space<smem>>
    %c2_94 = arith.constant 2 : index
    %c5_95 = arith.constant 5 : index
    %52 = memref.load %arg2[%c2_94, %c5_95] : memref<10x7xf32, #tpu.memory_space<smem>>
    %c3_96 = arith.constant 3 : index
    %c5_97 = arith.constant 5 : index
    %53 = memref.load %arg2[%c3_96, %c5_97] : memref<10x7xf32, #tpu.memory_space<smem>>
    %c4_98 = arith.constant 4 : index
    %c5_99 = arith.constant 5 : index
    %54 = memref.load %arg2[%c4_98, %c5_99] : memref<10x7xf32, #tpu.memory_space<smem>>
    %c5_100 = arith.constant 5 : index
    %c5_101 = arith.constant 5 : index
    %55 = memref.load %arg2[%c5_100, %c5_101] : memref<10x7xf32, #tpu.memory_space<smem>>
    %c6_102 = arith.constant 6 : index
    %c5_103 = arith.constant 5 : index
    %56 = memref.load %arg2[%c6_102, %c5_103] : memref<10x7xf32, #tpu.memory_space<smem>>
    %c7_104 = arith.constant 7 : index
    %c5_105 = arith.constant 5 : index
    %57 = memref.load %arg2[%c7_104, %c5_105] : memref<10x7xf32, #tpu.memory_space<smem>>
    %c8_106 = arith.constant 8 : index
    %c5_107 = arith.constant 5 : index
    %58 = memref.load %arg2[%c8_106, %c5_107] : memref<10x7xf32, #tpu.memory_space<smem>>
    %c9_108 = arith.constant 9 : index
    %c5_109 = arith.constant 5 : index
    %59 = memref.load %arg2[%c9_108, %c5_109] : memref<10x7xf32, #tpu.memory_space<smem>>
    %c0_110 = arith.constant 0 : index
    %c6_111 = arith.constant 6 : index
    %60 = memref.load %arg2[%c0_110, %c6_111] : memref<10x7xf32, #tpu.memory_space<smem>>
    %c1_112 = arith.constant 1 : index
    %c6_113 = arith.constant 6 : index
    %61 = memref.load %arg2[%c1_112, %c6_113] : memref<10x7xf32, #tpu.memory_space<smem>>
    %c2_114 = arith.constant 2 : index
    %c6_115 = arith.constant 6 : index
    %62 = memref.load %arg2[%c2_114, %c6_115] : memref<10x7xf32, #tpu.memory_space<smem>>
    %c3_116 = arith.constant 3 : index
    %c6_117 = arith.constant 6 : index
    %63 = memref.load %arg2[%c3_116, %c6_117] : memref<10x7xf32, #tpu.memory_space<smem>>
    %c4_118 = arith.constant 4 : index
    %c6_119 = arith.constant 6 : index
    %64 = memref.load %arg2[%c4_118, %c6_119] : memref<10x7xf32, #tpu.memory_space<smem>>
    %c5_120 = arith.constant 5 : index
    %c6_121 = arith.constant 6 : index
    %65 = memref.load %arg2[%c5_120, %c6_121] : memref<10x7xf32, #tpu.memory_space<smem>>
    %c6_122 = arith.constant 6 : index
    %c6_123 = arith.constant 6 : index
    %66 = memref.load %arg2[%c6_122, %c6_123] : memref<10x7xf32, #tpu.memory_space<smem>>
    %c7_124 = arith.constant 7 : index
    %c6_125 = arith.constant 6 : index
    %67 = memref.load %arg2[%c7_124, %c6_125] : memref<10x7xf32, #tpu.memory_space<smem>>
    %c8_126 = arith.constant 8 : index
    %c6_127 = arith.constant 6 : index
    %68 = memref.load %arg2[%c8_126, %c6_127] : memref<10x7xf32, #tpu.memory_space<smem>>
    %c9_128 = arith.constant 9 : index
    %c6_129 = arith.constant 6 : index
    %69 = memref.load %arg2[%c9_128, %c6_129] : memref<10x7xf32, #tpu.memory_space<smem>>
    %c0_130 = arith.constant 0 : index
    %c0_131 = arith.constant 0 : index
    %c0_132 = arith.constant 0 : index
    %c0_133 = arith.constant 0 : index
    %70 = vector.load %arg3[%c0_130, %c0_131, %c0_132, %c0_133] : memref<1x4x8x512xf32, #tpu.memory_space<vmem>>, vector<1x1x8x512xf32>
    %71 = vector.shape_cast %70 : vector<1x1x8x512xf32> to vector<8x512xf32>
    %c0_134 = arith.constant 0 : index
    %c1_135 = arith.constant 1 : index
    %c0_136 = arith.constant 0 : index
    %c0_137 = arith.constant 0 : index
    %72 = vector.load %arg3[%c0_134, %c1_135, %c0_136, %c0_137] : memref<1x4x8x512xf32, #tpu.memory_space<vmem>>, vector<1x1x8x512xf32>
    %73 = vector.shape_cast %72 : vector<1x1x8x512xf32> to vector<8x512xf32>
    %c0_138 = arith.constant 0 : index
    %c2_139 = arith.constant 2 : index
    %c0_140 = arith.constant 0 : index
    %c0_141 = arith.constant 0 : index
    %74 = vector.load %arg3[%c0_138, %c2_139, %c0_140, %c0_141] : memref<1x4x8x512xf32, #tpu.memory_space<vmem>>, vector<1x1x8x512xf32>
    %75 = vector.shape_cast %74 : vector<1x1x8x512xf32> to vector<8x512xf32>
    %c0_142 = arith.constant 0 : index
    %c3_143 = arith.constant 3 : index
    %c0_144 = arith.constant 0 : index
    %c0_145 = arith.constant 0 : index
    %76 = vector.load %arg3[%c0_142, %c3_143, %c0_144, %c0_145] : memref<1x4x8x512xf32, #tpu.memory_space<vmem>>, vector<1x1x8x512xf32>
    %77 = vector.shape_cast %76 : vector<1x1x8x512xf32> to vector<8x512xf32>
    %78 = arith.mulf %71, %71 : vector<8x512xf32>
    %79 = arith.mulf %73, %73 : vector<8x512xf32>
    %80 = arith.addf %78, %79 : vector<8x512xf32>
    %81 = arith.mulf %75, %75 : vector<8x512xf32>
    %82 = arith.addf %80, %81 : vector<8x512xf32>
    %83 = arith.mulf %77, %77 : vector<8x512xf32>
    %84 = arith.addf %82, %83 : vector<8x512xf32>
    %85 = vector.broadcast %40 : f32 to vector<8x512xf32>
    %86 = arith.mulf %85, %84 : vector<8x512xf32>
    %87 = vector.broadcast %50 : f32 to vector<8x512xf32>
    %88 = arith.subf %87, %86 : vector<8x512xf32>
    %89 = vector.broadcast %0 : f32 to vector<8x512xf32>
    %90 = arith.mulf %89, %71 : vector<8x512xf32>
    %91 = arith.addf %88, %90 : vector<8x512xf32>
    %92 = vector.broadcast %1 : f32 to vector<8x512xf32>
    %93 = arith.mulf %92, %73 : vector<8x512xf32>
    %94 = arith.addf %91, %93 : vector<8x512xf32>
    %95 = vector.broadcast %2 : f32 to vector<8x512xf32>
    %96 = arith.mulf %95, %75 : vector<8x512xf32>
    %97 = arith.addf %94, %96 : vector<8x512xf32>
    %98 = vector.broadcast %3 : f32 to vector<8x512xf32>
    %99 = arith.mulf %98, %77 : vector<8x512xf32>
    %100 = arith.addf %97, %99 : vector<8x512xf32>
    %101 = math.exp %100 : vector<8x512xf32>
    %102 = vector.broadcast %60 : f32 to vector<8x512xf32>
    %103 = arith.mulf %102, %101 : vector<8x512xf32>
    %cst = arith.constant 1.000000e+00 : f32
    %104 = vector.broadcast %cst : f32 to vector<8x512xf32>
    %105 = arith.subf %104, %101 : vector<8x512xf32>
    %cst_146 = arith.constant 1.000000e+00 : f32
    %106 = vector.broadcast %cst_146 : f32 to vector<8x512xf32>
    %107 = arith.subf %106, %103 : vector<8x512xf32>
    %108 = arith.addf %105, %103 : vector<8x512xf32>
    %109 = vector.broadcast %41 : f32 to vector<8x512xf32>
    %110 = arith.mulf %109, %84 : vector<8x512xf32>
    %111 = vector.broadcast %51 : f32 to vector<8x512xf32>
    %112 = arith.subf %111, %110 : vector<8x512xf32>
    %113 = vector.broadcast %4 : f32 to vector<8x512xf32>
    %114 = arith.mulf %113, %71 : vector<8x512xf32>
    %115 = arith.addf %112, %114 : vector<8x512xf32>
    %116 = vector.broadcast %5 : f32 to vector<8x512xf32>
    %117 = arith.mulf %116, %73 : vector<8x512xf32>
    %118 = arith.addf %115, %117 : vector<8x512xf32>
    %119 = vector.broadcast %6 : f32 to vector<8x512xf32>
    %120 = arith.mulf %119, %75 : vector<8x512xf32>
    %121 = arith.addf %118, %120 : vector<8x512xf32>
    %122 = vector.broadcast %7 : f32 to vector<8x512xf32>
    %123 = arith.mulf %122, %77 : vector<8x512xf32>
    %124 = arith.addf %121, %123 : vector<8x512xf32>
    %125 = math.exp %124 : vector<8x512xf32>
    %126 = vector.broadcast %61 : f32 to vector<8x512xf32>
    %127 = arith.mulf %126, %125 : vector<8x512xf32>
    %cst_147 = arith.constant 1.000000e+00 : f32
    %128 = vector.broadcast %cst_147 : f32 to vector<8x512xf32>
    %129 = arith.subf %128, %125 : vector<8x512xf32>
    %cst_148 = arith.constant 1.000000e+00 : f32
    %130 = vector.broadcast %cst_148 : f32 to vector<8x512xf32>
    %131 = arith.subf %130, %127 : vector<8x512xf32>
    %132 = arith.addf %129, %127 : vector<8x512xf32>
    %133 = arith.mulf %107, %131 : vector<8x512xf32>
    %134 = arith.mulf %108, %132 : vector<8x512xf32>
    %135 = arith.mulf %105, %129 : vector<8x512xf32>
    %136 = vector.broadcast %42 : f32 to vector<8x512xf32>
    %137 = arith.mulf %136, %84 : vector<8x512xf32>
    %138 = vector.broadcast %52 : f32 to vector<8x512xf32>
    %139 = arith.subf %138, %137 : vector<8x512xf32>
    %140 = vector.broadcast %8 : f32 to vector<8x512xf32>
    %141 = arith.mulf %140, %71 : vector<8x512xf32>
    %142 = arith.addf %139, %141 : vector<8x512xf32>
    %143 = vector.broadcast %9 : f32 to vector<8x512xf32>
    %144 = arith.mulf %143, %73 : vector<8x512xf32>
    %145 = arith.addf %142, %144 : vector<8x512xf32>
    %146 = vector.broadcast %10 : f32 to vector<8x512xf32>
    %147 = arith.mulf %146, %75 : vector<8x512xf32>
    %148 = arith.addf %145, %147 : vector<8x512xf32>
    %149 = vector.broadcast %11 : f32 to vector<8x512xf32>
    %150 = arith.mulf %149, %77 : vector<8x512xf32>
    %151 = arith.addf %148, %150 : vector<8x512xf32>
    %152 = math.exp %151 : vector<8x512xf32>
    %153 = vector.broadcast %62 : f32 to vector<8x512xf32>
    %154 = arith.mulf %153, %152 : vector<8x512xf32>
    %cst_149 = arith.constant 1.000000e+00 : f32
    %155 = vector.broadcast %cst_149 : f32 to vector<8x512xf32>
    %156 = arith.subf %155, %152 : vector<8x512xf32>
    %cst_150 = arith.constant 1.000000e+00 : f32
    %157 = vector.broadcast %cst_150 : f32 to vector<8x512xf32>
    %158 = arith.subf %157, %154 : vector<8x512xf32>
    %159 = arith.addf %156, %154 : vector<8x512xf32>
    %160 = arith.mulf %133, %158 : vector<8x512xf32>
    %161 = arith.mulf %134, %159 : vector<8x512xf32>
    %162 = arith.mulf %135, %156 : vector<8x512xf32>
    %163 = vector.broadcast %43 : f32 to vector<8x512xf32>
    %164 = arith.mulf %163, %84 : vector<8x512xf32>
    %165 = vector.broadcast %53 : f32 to vector<8x512xf32>
    %166 = arith.subf %165, %164 : vector<8x512xf32>
    %167 = vector.broadcast %12 : f32 to vector<8x512xf32>
    %168 = arith.mulf %167, %71 : vector<8x512xf32>
    %169 = arith.addf %166, %168 : vector<8x512xf32>
    %170 = vector.broadcast %13 : f32 to vector<8x512xf32>
    %171 = arith.mulf %170, %73 : vector<8x512xf32>
    %172 = arith.addf %169, %171 : vector<8x512xf32>
    %173 = vector.broadcast %14 : f32 to vector<8x512xf32>
    %174 = arith.mulf %173, %75 : vector<8x512xf32>
    %175 = arith.addf %172, %174 : vector<8x512xf32>
    %176 = vector.broadcast %15 : f32 to vector<8x512xf32>
    %177 = arith.mulf %176, %77 : vector<8x512xf32>
    %178 = arith.addf %175, %177 : vector<8x512xf32>
    %179 = math.exp %178 : vector<8x512xf32>
    %180 = vector.broadcast %63 : f32 to vector<8x512xf32>
    %181 = arith.mulf %180, %179 : vector<8x512xf32>
    %cst_151 = arith.constant 1.000000e+00 : f32
    %182 = vector.broadcast %cst_151 : f32 to vector<8x512xf32>
    %183 = arith.subf %182, %179 : vector<8x512xf32>
    %cst_152 = arith.constant 1.000000e+00 : f32
    %184 = vector.broadcast %cst_152 : f32 to vector<8x512xf32>
    %185 = arith.subf %184, %181 : vector<8x512xf32>
    %186 = arith.addf %183, %181 : vector<8x512xf32>
    %187 = arith.mulf %160, %185 : vector<8x512xf32>
    %188 = arith.mulf %161, %186 : vector<8x512xf32>
    %189 = arith.mulf %162, %183 : vector<8x512xf32>
    %190 = vector.broadcast %44 : f32 to vector<8x512xf32>
    %191 = arith.mulf %190, %84 : vector<8x512xf32>
    %192 = vector.broadcast %54 : f32 to vector<8x512xf32>
    %193 = arith.subf %192, %191 : vector<8x512xf32>
    %194 = vector.broadcast %16 : f32 to vector<8x512xf32>
    %195 = arith.mulf %194, %71 : vector<8x512xf32>
    %196 = arith.addf %193, %195 : vector<8x512xf32>
    %197 = vector.broadcast %17 : f32 to vector<8x512xf32>
    %198 = arith.mulf %197, %73 : vector<8x512xf32>
    %199 = arith.addf %196, %198 : vector<8x512xf32>
    %200 = vector.broadcast %18 : f32 to vector<8x512xf32>
    %201 = arith.mulf %200, %75 : vector<8x512xf32>
    %202 = arith.addf %199, %201 : vector<8x512xf32>
    %203 = vector.broadcast %19 : f32 to vector<8x512xf32>
    %204 = arith.mulf %203, %77 : vector<8x512xf32>
    %205 = arith.addf %202, %204 : vector<8x512xf32>
    %206 = math.exp %205 : vector<8x512xf32>
    %207 = vector.broadcast %64 : f32 to vector<8x512xf32>
    %208 = arith.mulf %207, %206 : vector<8x512xf32>
    %cst_153 = arith.constant 1.000000e+00 : f32
    %209 = vector.broadcast %cst_153 : f32 to vector<8x512xf32>
    %210 = arith.subf %209, %206 : vector<8x512xf32>
    %cst_154 = arith.constant 1.000000e+00 : f32
    %211 = vector.broadcast %cst_154 : f32 to vector<8x512xf32>
    %212 = arith.subf %211, %208 : vector<8x512xf32>
    %213 = arith.addf %210, %208 : vector<8x512xf32>
    %214 = arith.mulf %187, %212 : vector<8x512xf32>
    %215 = arith.mulf %188, %213 : vector<8x512xf32>
    %216 = arith.mulf %189, %210 : vector<8x512xf32>
    %217 = vector.broadcast %45 : f32 to vector<8x512xf32>
    %218 = arith.mulf %217, %84 : vector<8x512xf32>
    %219 = vector.broadcast %55 : f32 to vector<8x512xf32>
    %220 = arith.subf %219, %218 : vector<8x512xf32>
    %221 = vector.broadcast %20 : f32 to vector<8x512xf32>
    %222 = arith.mulf %221, %71 : vector<8x512xf32>
    %223 = arith.addf %220, %222 : vector<8x512xf32>
    %224 = vector.broadcast %21 : f32 to vector<8x512xf32>
    %225 = arith.mulf %224, %73 : vector<8x512xf32>
    %226 = arith.addf %223, %225 : vector<8x512xf32>
    %227 = vector.broadcast %22 : f32 to vector<8x512xf32>
    %228 = arith.mulf %227, %75 : vector<8x512xf32>
    %229 = arith.addf %226, %228 : vector<8x512xf32>
    %230 = vector.broadcast %23 : f32 to vector<8x512xf32>
    %231 = arith.mulf %230, %77 : vector<8x512xf32>
    %232 = arith.addf %229, %231 : vector<8x512xf32>
    %233 = math.exp %232 : vector<8x512xf32>
    %234 = vector.broadcast %65 : f32 to vector<8x512xf32>
    %235 = arith.mulf %234, %233 : vector<8x512xf32>
    %cst_155 = arith.constant 1.000000e+00 : f32
    %236 = vector.broadcast %cst_155 : f32 to vector<8x512xf32>
    %237 = arith.subf %236, %233 : vector<8x512xf32>
    %cst_156 = arith.constant 1.000000e+00 : f32
    %238 = vector.broadcast %cst_156 : f32 to vector<8x512xf32>
    %239 = arith.subf %238, %235 : vector<8x512xf32>
    %240 = arith.addf %237, %235 : vector<8x512xf32>
    %241 = arith.mulf %214, %239 : vector<8x512xf32>
    %242 = arith.mulf %215, %240 : vector<8x512xf32>
    %243 = arith.mulf %216, %237 : vector<8x512xf32>
    %244 = vector.broadcast %46 : f32 to vector<8x512xf32>
    %245 = arith.mulf %244, %84 : vector<8x512xf32>
    %246 = vector.broadcast %56 : f32 to vector<8x512xf32>
    %247 = arith.subf %246, %245 : vector<8x512xf32>
    %248 = vector.broadcast %24 : f32 to vector<8x512xf32>
    %249 = arith.mulf %248, %71 : vector<8x512xf32>
    %250 = arith.addf %247, %249 : vector<8x512xf32>
    %251 = vector.broadcast %25 : f32 to vector<8x512xf32>
    %252 = arith.mulf %251, %73 : vector<8x512xf32>
    %253 = arith.addf %250, %252 : vector<8x512xf32>
    %254 = vector.broadcast %26 : f32 to vector<8x512xf32>
    %255 = arith.mulf %254, %75 : vector<8x512xf32>
    %256 = arith.addf %253, %255 : vector<8x512xf32>
    %257 = vector.broadcast %27 : f32 to vector<8x512xf32>
    %258 = arith.mulf %257, %77 : vector<8x512xf32>
    %259 = arith.addf %256, %258 : vector<8x512xf32>
    %260 = math.exp %259 : vector<8x512xf32>
    %261 = vector.broadcast %66 : f32 to vector<8x512xf32>
    %262 = arith.mulf %261, %260 : vector<8x512xf32>
    %cst_157 = arith.constant 1.000000e+00 : f32
    %263 = vector.broadcast %cst_157 : f32 to vector<8x512xf32>
    %264 = arith.subf %263, %260 : vector<8x512xf32>
    %cst_158 = arith.constant 1.000000e+00 : f32
    %265 = vector.broadcast %cst_158 : f32 to vector<8x512xf32>
    %266 = arith.subf %265, %262 : vector<8x512xf32>
    %267 = arith.addf %264, %262 : vector<8x512xf32>
    %268 = arith.mulf %241, %266 : vector<8x512xf32>
    %269 = arith.mulf %242, %267 : vector<8x512xf32>
    %270 = arith.mulf %243, %264 : vector<8x512xf32>
    %271 = vector.broadcast %47 : f32 to vector<8x512xf32>
    %272 = arith.mulf %271, %84 : vector<8x512xf32>
    %273 = vector.broadcast %57 : f32 to vector<8x512xf32>
    %274 = arith.subf %273, %272 : vector<8x512xf32>
    %275 = vector.broadcast %28 : f32 to vector<8x512xf32>
    %276 = arith.mulf %275, %71 : vector<8x512xf32>
    %277 = arith.addf %274, %276 : vector<8x512xf32>
    %278 = vector.broadcast %29 : f32 to vector<8x512xf32>
    %279 = arith.mulf %278, %73 : vector<8x512xf32>
    %280 = arith.addf %277, %279 : vector<8x512xf32>
    %281 = vector.broadcast %30 : f32 to vector<8x512xf32>
    %282 = arith.mulf %281, %75 : vector<8x512xf32>
    %283 = arith.addf %280, %282 : vector<8x512xf32>
    %284 = vector.broadcast %31 : f32 to vector<8x512xf32>
    %285 = arith.mulf %284, %77 : vector<8x512xf32>
    %286 = arith.addf %283, %285 : vector<8x512xf32>
    %287 = math.exp %286 : vector<8x512xf32>
    %288 = vector.broadcast %67 : f32 to vector<8x512xf32>
    %289 = arith.mulf %288, %287 : vector<8x512xf32>
    %cst_159 = arith.constant 1.000000e+00 : f32
    %290 = vector.broadcast %cst_159 : f32 to vector<8x512xf32>
    %291 = arith.subf %290, %287 : vector<8x512xf32>
    %cst_160 = arith.constant 1.000000e+00 : f32
    %292 = vector.broadcast %cst_160 : f32 to vector<8x512xf32>
    %293 = arith.subf %292, %289 : vector<8x512xf32>
    %294 = arith.addf %291, %289 : vector<8x512xf32>
    %295 = arith.mulf %268, %293 : vector<8x512xf32>
    %296 = arith.mulf %269, %294 : vector<8x512xf32>
    %297 = arith.mulf %270, %291 : vector<8x512xf32>
    %298 = vector.broadcast %48 : f32 to vector<8x512xf32>
    %299 = arith.mulf %298, %84 : vector<8x512xf32>
    %300 = vector.broadcast %58 : f32 to vector<8x512xf32>
    %301 = arith.subf %300, %299 : vector<8x512xf32>
    %302 = vector.broadcast %32 : f32 to vector<8x512xf32>
    %303 = arith.mulf %302, %71 : vector<8x512xf32>
    %304 = arith.addf %301, %303 : vector<8x512xf32>
    %305 = vector.broadcast %33 : f32 to vector<8x512xf32>
    %306 = arith.mulf %305, %73 : vector<8x512xf32>
    %307 = arith.addf %304, %306 : vector<8x512xf32>
    %308 = vector.broadcast %34 : f32 to vector<8x512xf32>
    %309 = arith.mulf %308, %75 : vector<8x512xf32>
    %310 = arith.addf %307, %309 : vector<8x512xf32>
    %311 = vector.broadcast %35 : f32 to vector<8x512xf32>
    %312 = arith.mulf %311, %77 : vector<8x512xf32>
    %313 = arith.addf %310, %312 : vector<8x512xf32>
    %314 = math.exp %313 : vector<8x512xf32>
    %315 = vector.broadcast %68 : f32 to vector<8x512xf32>
    %316 = arith.mulf %315, %314 : vector<8x512xf32>
    %cst_161 = arith.constant 1.000000e+00 : f32
    %317 = vector.broadcast %cst_161 : f32 to vector<8x512xf32>
    %318 = arith.subf %317, %314 : vector<8x512xf32>
    %cst_162 = arith.constant 1.000000e+00 : f32
    %319 = vector.broadcast %cst_162 : f32 to vector<8x512xf32>
    %320 = arith.subf %319, %316 : vector<8x512xf32>
    %321 = arith.addf %318, %316 : vector<8x512xf32>
    %322 = arith.mulf %295, %320 : vector<8x512xf32>
    %323 = arith.mulf %296, %321 : vector<8x512xf32>
    %324 = arith.mulf %297, %318 : vector<8x512xf32>
    %325 = vector.broadcast %49 : f32 to vector<8x512xf32>
    %326 = arith.mulf %325, %84 : vector<8x512xf32>
    %327 = vector.broadcast %59 : f32 to vector<8x512xf32>
    %328 = arith.subf %327, %326 : vector<8x512xf32>
    %329 = vector.broadcast %36 : f32 to vector<8x512xf32>
    %330 = arith.mulf %329, %71 : vector<8x512xf32>
    %331 = arith.addf %328, %330 : vector<8x512xf32>
    %332 = vector.broadcast %37 : f32 to vector<8x512xf32>
    %333 = arith.mulf %332, %73 : vector<8x512xf32>
    %334 = arith.addf %331, %333 : vector<8x512xf32>
    %335 = vector.broadcast %38 : f32 to vector<8x512xf32>
    %336 = arith.mulf %335, %75 : vector<8x512xf32>
    %337 = arith.addf %334, %336 : vector<8x512xf32>
    %338 = vector.broadcast %39 : f32 to vector<8x512xf32>
    %339 = arith.mulf %338, %77 : vector<8x512xf32>
    %340 = arith.addf %337, %339 : vector<8x512xf32>
    %341 = math.exp %340 : vector<8x512xf32>
    %342 = vector.broadcast %69 : f32 to vector<8x512xf32>
    %343 = arith.mulf %342, %341 : vector<8x512xf32>
    %cst_163 = arith.constant 1.000000e+00 : f32
    %344 = vector.broadcast %cst_163 : f32 to vector<8x512xf32>
    %345 = arith.subf %344, %341 : vector<8x512xf32>
    %cst_164 = arith.constant 1.000000e+00 : f32
    %346 = vector.broadcast %cst_164 : f32 to vector<8x512xf32>
    %347 = arith.subf %346, %343 : vector<8x512xf32>
    %348 = arith.addf %345, %343 : vector<8x512xf32>
    %349 = arith.mulf %322, %347 : vector<8x512xf32>
    %350 = arith.mulf %323, %348 : vector<8x512xf32>
    %351 = arith.mulf %324, %345 : vector<8x512xf32>
    %352 = arith.subf %349, %351 : vector<8x512xf32>
    %353 = arith.subf %350, %351 : vector<8x512xf32>
    %354 = arith.addf %349, %353 : vector<8x512xf32>
    %cst_165 = arith.constant 1.000000e+00 : f32
    %355 = vector.broadcast %cst_165 : f32 to vector<8x512xf32>
    %356 = arith.divf %355, %354 : vector<8x512xf32>
    %357 = arith.mulf %352, %356 : vector<8x512xf32>
    %c0_166 = arith.constant 0 : index
    %c0_167 = arith.constant 0 : index
    %c0_168 = arith.constant 0 : index
    %c0_169 = arith.constant 0 : index
    %358 = vector.load %arg4[%c0_166, %c0_167, %c0_168, %c0_169] : memref<1x3x8x512xf32, #tpu.memory_space<vmem>>, vector<1x1x8x512xf32>
    %359 = vector.shape_cast %358 : vector<1x1x8x512xf32> to vector<8x512xf32>
    %360 = vector.shape_cast %357 : vector<8x512xf32> to vector<1x1x8x512xf32>
    tpu.vector_store %arg4[%c0_166, %c0_167, %c0_168, %c0_169], %360 {strides = array<i32>} : memref<1x3x8x512xf32, #tpu.memory_space<vmem>>, vector<1x1x8x512xf32>,
    %361 = arith.mulf %353, %356 : vector<8x512xf32>
    %c0_170 = arith.constant 0 : index
    %c1_171 = arith.constant 1 : index
    %c0_172 = arith.constant 0 : index
    %c0_173 = arith.constant 0 : index
    %362 = vector.load %arg4[%c0_170, %c1_171, %c0_172, %c0_173] : memref<1x3x8x512xf32, #tpu.memory_space<vmem>>, vector<1x1x8x512xf32>
    %363 = vector.shape_cast %362 : vector<1x1x8x512xf32> to vector<8x512xf32>
    %364 = vector.shape_cast %361 : vector<8x512xf32> to vector<1x1x8x512xf32>
    tpu.vector_store %arg4[%c0_170, %c1_171, %c0_172, %c0_173], %364 {strides = array<i32>} : memref<1x3x8x512xf32, #tpu.memory_space<vmem>>, vector<1x1x8x512xf32>,
    %365 = arith.mulf %351, %356 : vector<8x512xf32>
    %c0_174 = arith.constant 0 : index
    %c2_175 = arith.constant 2 : index
    %c0_176 = arith.constant 0 : index
    %c0_177 = arith.constant 0 : index
    %366 = vector.load %arg4[%c0_174, %c2_175, %c0_176, %c0_177] : memref<1x3x8x512xf32, #tpu.memory_space<vmem>>, vector<1x1x8x512xf32>
    %367 = vector.shape_cast %366 : vector<1x1x8x512xf32> to vector<8x512xf32>
    %368 = vector.shape_cast %365 : vector<8x512xf32> to vector<1x1x8x512xf32>
    tpu.vector_store %arg4[%c0_174, %c2_175, %c0_176, %c0_177], %368 {strides = array<i32>} : memref<1x3x8x512xf32, #tpu.memory_space<vmem>>, vector<1x1x8x512xf32>,
    return
  }
  func.func @transform_0(%arg0: i32, %arg1: i32) -> (i32, i32) {
    %c0_i32 = arith.constant 0 : i32
    %c0_i32_0 = arith.constant 0 : i32
    %c0_i32_1 = arith.constant 0 : i32
    return %c0_i32, %c0_i32_0 : i32, i32
  }
  func.func @transform_1(%arg0: i32, %arg1: i32) -> (i32, i32, i32, i32) {
    %c0_i32 = arith.constant 0 : i32
    %c0_i32_0 = arith.constant 0 : i32
    %c0_i32_1 = arith.constant 0 : i32
    return %arg0, %c0_i32, %arg1, %c0_i32_0 : i32, i32, i32, i32
  }
  func.func @transform_2(%arg0: i32, %arg1: i32) -> (i32, i32, i32, i32) {
    %c0_i32 = arith.constant 0 : i32
    %c0_i32_0 = arith.constant 0 : i32
    %c0_i32_1 = arith.constant 0 : i32
    return %arg0, %c0_i32, %arg1, %c0_i32_0 : i32, i32, i32, i32
  }
}

</mosaic_0001>

<llo_original>
// kernel: ds1_forward.1
$region0: #{ds1_forward.1}
  #allocation0 [shape = 'u32[]', space=smem, size = 0x4, offset = 0x4, fixed_abs, tag = 'smem constant byte address 0x4 - core index']
  #allocation1 [shape = 'u32[144,128]{1,0:T(1,128)}', space=vmem, size = 0x12000, scoped, tag = 'internal scratch']
  %s0 = inlined_call_operand.vmem [shape: f32[10,7], index: 0, kind: input, shape index: {}]
  %s1 = inlined_call_operand.vmem [shape: f32[2,4,8,512], index: 1, kind: input, shape index: {}]
  %s2 = inlined_call_operand.vmem [shape: f32[2,3,8,512], index: 2, kind: output, shape index: {}]
  %s3 = sld [smem:[#allocation0]]
  $region45: #{ds1_forward.1} parent=0
    _
  %s5 = ssub.s32 1, %s3
  %s6 = scalar_select 0, %s5, %s3
  $region1: #{ds1_forward.1} parent=0
    #allocation2 [shape = 'u8[8192]{0}', space=smem, size = 0x2000, scoped, tag = 'input window, operand 0, single buffered']
    #allocation3 [shape = 's32[2]{0}', space=sflag, size = 0x8, scoped, tag = 'scoped memory for ds1_forward.1']
    %7 = vsyncpa [#allocation3], 0
    loop: start=0, step=1, limit=4
    $region2: #{ds1_forward.1} parent=1 // loop_pre_header
      _
    $region3: #{ds1_forward.1} parent=1 // loop_header
      %s9 = sphi 0, %s13
      %p10 = scmp.ge.s32.totalorder %s9, 4
      %s16 = sphi 0, %s28
      %s17 = sphi 0, %s24
      %s18 = sphi 0, %s16
      %s19 = sphi 0, %s17
      %s20 = sphi 0, %s18
      %s21 = sphi 0, %s19
      %s29 = sphi 0, %s29
      %s31 = sphi 0, %s29
      %s32 = sphi 0, %s31
      %s46 = sphi 0, %s32
      %s54 = sphi 0, %s56
      %s57 = sphi 0, %s54
      %s58 = sphi 0, %s57
      %s74 = sphi 0, %s58
      %s82 = sphi 0, %s84
      %s85 = sphi 0, %s82
      %s86 = sphi 0, %s85
      %s102 = sphi 0, %s86
    $region4: #{ds1_forward.1} parent=1 // loop_header_branch
      %12 = sbr.rel (%p10) target = $region8
    $region5: #{ds1_forward.1} parent=1 // loop_body
      %s14 = ssub.s32 %s9, 1
      %s15 = ssub.s32 %s9, 2
      %s22 = sadd.s32 1, %s17
      %p23 = scmp.ge.s32.totalorder %s22, 1
      %s24 = scalar_select %p23, 0, %s22
      %s25 = sadd.s32 1, %s16
      %s26 = scalar_select %p23, %s25, %s16
      %p27 = scmp.ge.s32.totalorder %s26, 2
      %s28 = scalar_select %p27, 0, %s26
      %s30 = sadd.s32 %s29, 1
      %p33 = scmp.eq.s32.totalorder %s9, 1
      %p34 = scmp.ne.s32.totalorder %s29, %s31
      %p35 = scmp.eq.s32.totalorder %s9, 0
      %p36 = por %p34, %p35
      %p37 = scmp.ne.s32.totalorder %s29, %s31
      %p38 = scmp.eq.s32.totalorder %s14, 1
      %p39 = por %p37, %p38
      %p40 = scmp.ne.s32.totalorder %s31, %s32
      %p41 = scmp.eq.s32.totalorder %s14, 0
      %p42 = por %p40, %p41
      %p43 = scmp.ne.s32.totalorder %s31, %s32
      %p44 = scmp.eq.s32.totalorder %s15, 1
      %p45 = por %p43, %p44
      %p47 = scmp.ne.s32.totalorder %s32, %s46
      %p48 = scmp.eq.s32.totalorder %s15, 0
      %p49 = por %p47, %p48
      %s50 = ssub.s32 %s16, %s28
      %s51 = ssub.s32 %s17, %s24
      %s52 = sor.u32 %s50, %s51
      %p53 = scmp.eq.s32.totalorder %s52, 0
      %s55 = sadd.s32 %s54, 1
      %s56 = scalar_select %p53, %s54, %s55
      %p59 = pneg %p53
      %p60 = scmp.eq.s32.totalorder %s9, 1
      %p61 = por %p59, %p60
      %p62 = scmp.ne.s32.totalorder %s54, %s57
      %p63 = scmp.eq.s32.totalorder %s9, 0
      %p64 = por %p62, %p63
      %p65 = scmp.ne.s32.totalorder %s54, %s57
      %p66 = scmp.eq.s32.totalorder %s14, 1
      %p67 = por %p65, %p66
      %p68 = scmp.ne.s32.totalorder %s57, %s58
      %p69 = scmp.eq.s32.totalorder %s14, 0
      %p70 = por %p68, %p69
      %p71 = scmp.ne.s32.totalorder %s57, %s58
      %p72 = scmp.eq.s32.totalorder %s15, 1
      %p73 = por %p71, %p72
      %p75 = scmp.ne.s32.totalorder %s58, %s74
      %p76 = scmp.eq.s32.totalorder %s15, 0
      %p77 = por %p75, %p76
      %s78 = ssub.s32 %s16, %s28
      %s79 = ssub.s32 %s17, %s24
      %s80 = sor.u32 %s78, %s79
      %p81 = scmp.eq.s32.totalorder %s80, 0
      %s83 = sadd.s32 %s82, 1
      %s84 = scalar_select %p81, %s82, %s83
      %p87 = pneg %p81
      %p88 = scmp.eq.s32.totalorder %s9, 1
      %p89 = por %p87, %p88
      %p90 = scmp.ne.s32.totalorder %s82, %s85
      %p91 = scmp.eq.s32.totalorder %s9, 0
      %p92 = por %p90, %p91
      %p93 = scmp.ne.s32.totalorder %s82, %s85
      %p94 = scmp.eq.s32.totalorder %s14, 1
      %p95 = por %p93, %p94
      %p96 = scmp.ne.s32.totalorder %s85, %s86
      %p97 = scmp.eq.s32.totalorder %s14, 0
      %p98 = por %p96, %p97
      %p99 = scmp.ne.s32.totalorder %s85, %s86
      %p100 = scmp.eq.s32.totalorder %s15, 1
      %p101 = por %p99, %p100
      %p103 = scmp.ne.s32.totalorder %s86, %s102
      %p104 = scmp.eq.s32.totalorder %s15, 0
      %p105 = por %p103, %p104
      %p106 = scmp.le.s32.totalorder 1, %s9
      %p107 = scmp.lt.s32.totalorder %s9, 3
      %p108 = pnand %p106, %p107
      %p109 = pneg %p108
      // Predicated region
      $region9: #{ds1_forward.1} parent=5 // pred_check
        _
      $region10: #{ds1_forward.1} parent=5 // pred_check_branch
        %111 = sbr.rel (%p108) target = $region12
      $region11: #{ds1_forward.1} parent=5 // pred_region
        %s112 = ssub.s32 %s9, 1
        // Predicated region
        $region13: #{ds1_forward.1} parent=11 // pred_check
          %p113 = pneg %p42
        $region14: #{ds1_forward.1} parent=11 // pred_check_branch
          %115 = sbr.rel (%p113) target = $region16
        $region15: #{ds1_forward.1} parent=11 // pred_region
          %s117 = ssub.s32 256, 256
          %118 = vsyncadd [#allocation3], %s117
          %s119 = sshll.u32 %s0, 4
          %s120 = int_to_ptr.vmem [resolvable:$true] %s119
          %125 = dma.vmem_to_smem %s120, 256, [#allocation2], [#allocation3], 128, 128, 8
        $region16: #{ds1_forward.1} parent=11 // pred_fallthru
          _
      $region12: #{ds1_forward.1} parent=5 // pred_fallthru
        _
      %p126 = scmp.lt.s32.totalorder %s9, 2
      // Predicated region
      $region17: #{ds1_forward.1} parent=5 // pred_check
        %p127 = pneg %p126
      $region18: #{ds1_forward.1} parent=5 // pred_check_branch
        %129 = sbr.rel (%p127) target = $region20
      $region19: #{ds1_forward.1} parent=5 // pred_region
        // Predicated region
        $region21: #{ds1_forward.1} parent=19 // pred_check
          %p130 = pneg %p64
        $region22: #{ds1_forward.1} parent=19 // pred_check_branch
          %132 = sbr.rel (%p130) target = $region24
        $region23: #{ds1_forward.1} parent=19 // pred_region
          %p133 = scmp.lt.s32.totalorder %s16, 1
          %s134 = scalar_select %p133, %s16, 1
          %p135 = scmp.lt.s32.totalorder %s17, 0
          %s136 = scalar_select %p135, %s17, 0
          %s137 = smul.addr %s136, 4
          %s138 = smul.addr %s134, 16
          %s139 = sadd.s32 %s137, %s138
          %s140 = smul.addr %s139, 8
          %s141 = scalar_lea.vmem %s1, %s140
        $region24: #{ds1_forward.1} parent=19 // pred_fallthru
          _
      $region20: #{ds1_forward.1} parent=5 // pred_fallthru
        _
      %p142 = scmp.le.s32.totalorder 1, %s9
      %p143 = scmp.lt.s32.totalorder %s9, 3
      %p144 = pnand %p142, %p143
      %p145 = pneg %p144
      // Predicated region
      $region25: #{ds1_forward.1} parent=5 // pred_check
        _
      $region26: #{ds1_forward.1} parent=5 // pred_check_branch
        %147 = sbr.rel (%p144) target = $region28
      $region27: #{ds1_forward.1} parent=5 // pred_region
        %s148 = ssub.s32 %s9, 1
        // Predicated region
        $region29: #{ds1_forward.1} parent=27 // pred_check
          %p149 = pneg %p42
        $region30: #{ds1_forward.1} parent=27 // pred_check_branch
          %151 = sbr.rel (%p149) target = $region32
        $region31: #{ds1_forward.1} parent=27 // pred_region
          %152 = dma.done [#allocation3], 256
        $region32: #{ds1_forward.1} parent=27 // pred_fallthru
          _
        %153 = sfence
        %p154 = pneg %p42
        %p155 = pneg %p39
        %p156 = scmp.lt.s32.totalorder %s18, 1
        %s157 = scalar_select %p156, %s18, 1
        %p158 = scmp.lt.s32.totalorder %s19, 0
        %s159 = scalar_select %p158, %s19, 0
        %s160 = smul.addr %s159, 4
        %s161 = smul.addr %s157, 16
        %s162 = sadd.s32 %s160, %s161
        %s163 = smul.addr %s162, 8
        %s164 = scalar_lea.vmem %s1, %s163
        %p165 = pneg %p70
        %p166 = pneg %p67
        %p167 = pneg %p98
        %p168 = pneg %p95
        %p169 = scmp.lt.s32.totalorder %s18, 1
        %s170 = scalar_select %p169, %s18, 1
        %p171 = scmp.lt.s32.totalorder %s19, 0
        %s172 = scalar_select %p171, %s19, 0
        %s173 = smul.addr %s172, 4
        %s174 = smul.addr %s170, 12
        %s175 = sadd.s32 %s173, %s174
        %s176 = smul.addr %s175, 8
        %s177 = scalar_lea.vmem %s2, %s176
        %p178 = scmp.lt.s32.totalorder %s18, 1
        %s179 = scalar_select %p178, %s18, 1
        %p180 = scmp.lt.s32.totalorder %s19, 0
        %s181 = scalar_select %p180, %s19, 0
        %s182 = smul.addr %s181, 4
        %s183 = smul.addr %s179, 16
        %s184 = sadd.s32 %s182, %s183
        %s185 = smul.addr %s184, 8
        %s186 = scalar_lea.vmem %s1, %s185
        %p187 = scmp.lt.s32.totalorder %s18, 1
        %s188 = scalar_select %p187, %s18, 1
        %p189 = scmp.lt.s32.totalorder %s19, 0
        %s190 = scalar_select %p189, %s19, 0
        %s191 = smul.addr %s190, 4
        %s192 = smul.addr %s188, 12
        %s193 = sadd.s32 %s191, %s192
        %s194 = smul.addr %s193, 8
        %s195 = scalar_lea.vmem %s2, %s194
        %s196 = sld [smem:[#allocation2]]
        %s197 = sld [smem:[#allocation2 + $0x1]]
        %s198 = sld [smem:[#allocation2 + $0x2]]
        %s199 = sld [smem:[#allocation2 + $0x3]]
        %s200 = sld [smem:[#allocation2 + $0x80]]
        %s201 = sld [smem:[#allocation2 + $0x81]]
        %s202 = sld [smem:[#allocation2 + $0x82]]
        %s203 = sld [smem:[#allocation2 + $0x83]]
        %s204 = sld [smem:[#allocation2 + $0x100]]
        %s205 = sld [smem:[#allocation2 + $0x101]]
        %s206 = sld [smem:[#allocation2 + $0x102]]
        %s207 = sld [smem:[#allocation2 + $0x103]]
        %s208 = sld [smem:[#allocation2 + $0x180]]
        %s209 = sld [smem:[#allocation2 + $0x181]]
        %s210 = sld [smem:[#allocation2 + $0x182]]
        %s211 = sld [smem:[#allocation2 + $0x183]]
        %s212 = sld [smem:[#allocation2 + $0x200]]
        %s213 = sld [smem:[#allocation2 + $0x201]]
        %s214 = sld [smem:[#allocation2 + $0x202]]
        %s215 = sld [smem:[#allocation2 + $0x203]]
        %s216 = sld [smem:[#allocation2 + $0x280]]
        %s217 = sld [smem:[#allocation2 + $0x281]]
        %s218 = sld [smem:[#allocation2 + $0x282]]
        %s219 = sld [smem:[#allocation2 + $0x283]]
        %s220 = sld [smem:[#allocation2 + $0x300]]
        %s221 = sld [smem:[#allocation2 + $0x301]]
        %s222 = sld [smem:[#allocation2 + $0x302]]
        %s223 = sld [smem:[#allocation2 + $0x303]]
        %s224 = sld [smem:[#allocation2 + $0x380]]
        %s225 = sld [smem:[#allocation2 + $0x381]]
        %s226 = sld [smem:[#allocation2 + $0x382]]
        %s227 = sld [smem:[#allocation2 + $0x383]]
        %s228 = sld [smem:[#allocation2 + $0x400]]
        %s229 = sld [smem:[#allocation2 + $0x401]]
        %s230 = sld [smem:[#allocation2 + $0x402]]
        %s231 = sld [smem:[#allocation2 + $0x403]]
        %s232 = sld [smem:[#allocation2 + $0x480]]
        %s233 = sld [smem:[#allocation2 + $0x481]]
        %s234 = sld [smem:[#allocation2 + $0x482]]
        %s235 = sld [smem:[#allocation2 + $0x483]]
        %s236 = sld [smem:[#allocation2 + $0x4]]
        %s237 = sld [smem:[#allocation2 + $0x84]]
        %s238 = sld [smem:[#allocation2 + $0x104]]
        %s239 = sld [smem:[#allocation2 + $0x184]]
        %s240 = sld [smem:[#allocation2 + $0x204]]
        %s241 = sld [smem:[#allocation2 + $0x284]]
        %s242 = sld [smem:[#allocation2 + $0x304]]
        %s243 = sld [smem:[#allocation2 + $0x384]]
        %s244 = sld [smem:[#allocation2 + $0x404]]
        %s245 = sld [smem:[#allocation2 + $0x484]]
        %s246 = sld [smem:[#allocation2 + $0x5]]
        %s247 = sld [smem:[#allocation2 + $0x85]]
        %s248 = sld [smem:[#allocation2 + $0x105]]
        %s249 = sld [smem:[#allocation2 + $0x185]]
        %s250 = sld [smem:[#allocation2 + $0x205]]
        %s251 = sld [smem:[#allocation2 + $0x285]]
        %s252 = sld [smem:[#allocation2 + $0x305]]
        %s253 = sld [smem:[#allocation2 + $0x385]]
        %s254 = sld [smem:[#allocation2 + $0x405]]
        %s255 = sld [smem:[#allocation2 + $0x485]]
        %s256 = sld [smem:[#allocation2 + $0x6]]
        %s257 = sld [smem:[#allocation2 + $0x86]]
        %s258 = sld [smem:[#allocation2 + $0x106]]
        %s259 = sld [smem:[#allocation2 + $0x186]]
        %s260 = sld [smem:[#allocation2 + $0x206]]
        %s261 = sld [smem:[#allocation2 + $0x286]]
        %s262 = sld [smem:[#allocation2 + $0x306]]
        %s263 = sld [smem:[#allocation2 + $0x386]]
        %s264 = sld [smem:[#allocation2 + $0x406]]
        %s265 = sld [smem:[#allocation2 + $0x486]]
        %v266 = vld [vmem:[%s186] sm:$0xff]
        %v267 = vld [vmem:[%s186 + $0x8] sm:$0xff]
        %v268 = vld [vmem:[%s186 + $0x10] sm:$0xff]
        %v269 = vld [vmem:[%s186 + $0x18] sm:$0xff]
        %s270 = scalar_lea.vmem %s186, 32
        %v271 = vld [vmem:[%s270] sm:$0xff]
        %v272 = vld [vmem:[%s270 + $0x8] sm:$0xff]
        %v273 = vld [vmem:[%s270 + $0x10] sm:$0xff]
        %v274 = vld [vmem:[%s270 + $0x18] sm:$0xff]
        %s275 = scalar_lea.vmem %s186, 64
        %v276 = vld [vmem:[%s275] sm:$0xff]
        %v277 = vld [vmem:[%s275 + $0x8] sm:$0xff]
        %v278 = vld [vmem:[%s275 + $0x10] sm:$0xff]
        %v279 = vld [vmem:[%s275 + $0x18] sm:$0xff]
        %s280 = scalar_lea.vmem %s186, 96
        %v281 = vld [vmem:[%s280] sm:$0xff]
        %v282 = vld [vmem:[%s280 + $0x8] sm:$0xff]
        %v283 = vld [vmem:[%s280 + $0x10] sm:$0xff]
        %v284 = vld [vmem:[%s280 + $0x18] sm:$0xff]
        %v285 = vmul.f32 %v266, %v266
        %v286 = vmul.f32 %v267, %v267
        %v287 = vmul.f32 %v268, %v268
        %v288 = vmul.f32 %v269, %v269
        %v289 = vmul.f32 %v271, %v271
        %v290 = vmul.f32 %v272, %v272
        %v291 = vmul.f32 %v273, %v273
        %v292 = vmul.f32 %v274, %v274
        %v293 = vadd.f32 %v285, %v289
        %v294 = vadd.f32 %v286, %v290
        %v295 = vadd.f32 %v287, %v291
        %v296 = vadd.f32 %v288, %v292
        %v297 = vmul.f32 %v276, %v276
        %v298 = vmul.f32 %v277, %v277
        %v299 = vmul.f32 %v278, %v278
        %v300 = vmul.f32 %v279, %v279
        %v301 = vadd.f32 %v293, %v297
        %v302 = vadd.f32 %v294, %v298
        %v303 = vadd.f32 %v295, %v299
        %v304 = vadd.f32 %v296, %v300
        %v305 = vmul.f32 %v281, %v281
        %v306 = vmul.f32 %v282, %v282
        %v307 = vmul.f32 %v283, %v283
        %v308 = vmul.f32 %v284, %v284
        %v309 = vadd.f32 %v301, %v305
        %v310 = vadd.f32 %v302, %v306
        %v311 = vadd.f32 %v303, %v307
        %v312 = vadd.f32 %v304, %v308
        %v313 = vstv %s236
        %v314 = vmul.f32 %v313, %v309
        %v315 = vmul.f32 %v313, %v310
        %v316 = vmul.f32 %v313, %v311
        %v317 = vmul.f32 %v313, %v312
        %v318 = vstv %s246
        %v319 = vsub.f32 %v318, %v314
        %v320 = vsub.f32 %v318, %v315
        %v321 = vsub.f32 %v318, %v316
        %v322 = vsub.f32 %v318, %v317
        %v323 = vstv %s196
        %v324 = vmul.f32 %v323, %v266
        %v325 = vmul.f32 %v323, %v267
        %v326 = vmul.f32 %v323, %v268
        %v327 = vmul.f32 %v323, %v269
        %v328 = vadd.f32 %v319, %v324
        %v329 = vadd.f32 %v320, %v325
        %v330 = vadd.f32 %v321, %v326
        %v331 = vadd.f32 %v322, %v327
        %v332 = vstv %s197
        %v333 = vmul.f32 %v332, %v271
        %v334 = vmul.f32 %v332, %v272
        %v335 = vmul.f32 %v332, %v273
        %v336 = vmul.f32 %v332, %v274
        %v337 = vadd.f32 %v328, %v333
        %v338 = vadd.f32 %v329, %v334
        %v339 = vadd.f32 %v330, %v335
        %v340 = vadd.f32 %v331, %v336
        %v341 = vstv %s198
        %v342 = vmul.f32 %v341, %v276
        %v343 = vmul.f32 %v341, %v277
        %v344 = vmul.f32 %v341, %v278
        %v345 = vmul.f32 %v341, %v279
        %v346 = vadd.f32 %v337, %v342
        %v347 = vadd.f32 %v338, %v343
        %v348 = vadd.f32 %v339, %v344
        %v349 = vadd.f32 %v340, %v345
        %v350 = vstv %s199
        %v351 = vmul.f32 %v350, %v281
        %v352 = vmul.f32 %v350, %v282
        %v353 = vmul.f32 %v350, %v283
        %v354 = vmul.f32 %v350, %v284
        %v355 = vadd.f32 %v346, %v351
        %v356 = vadd.f32 %v347, %v352
        %v357 = vadd.f32 %v348, %v353
        %v358 = vadd.f32 %v349, %v354
        %v359 = vmul.f32 %v355, 1.442695
        %v360 = vpow.pop %v359
        %v361 = vmul.f32 %v356, 1.442695
        %v362 = vpow.pop %v361
        %v363 = vmul.f32 %v357, 1.442695
        %v364 = vpow.pop %v363
        %v365 = vmul.f32 %v358, 1.442695
        %v366 = vpow.pop %v365
        %v367 = vstv %s256
        %v368 = vmul.f32 %v367, %v360
        %v369 = vmul.f32 %v367, %v362
        %v370 = vmul.f32 %v367, %v364
        %v371 = vmul.f32 %v367, %v366
        %v372 = vsub.f32 1.0, %v360
        %v373 = vsub.f32 1.0, %v362
        %v374 = vsub.f32 1.0, %v364
        %v375 = vsub.f32 1.0, %v366
        %v376 = vsub.f32 1.0, %v368
        %v377 = vsub.f32 1.0, %v369
        %v378 = vsub.f32 1.0, %v370
        %v379 = vsub.f32 1.0, %v371
        %v380 = vadd.f32 %v372, %v368
        %v381 = vadd.f32 %v373, %v369
        %v382 = vadd.f32 %v374, %v370
        %v383 = vadd.f32 %v375, %v371
        %v384 = vstv %s237
        %v385 = vmul.f32 %v384, %v309
        %v386 = vmul.f32 %v384, %v310
        %v387 = vmul.f32 %v384, %v311
        %v388 = vmul.f32 %v384, %v312
        %v389 = vstv %s247
        %v390 = vsub.f32 %v389, %v385
        %v391 = vsub.f32 %v389, %v386
        %v392 = vsub.f32 %v389, %v387
        %v393 = vsub.f32 %v389, %v388
        %v394 = vstv %s200
        %v395 = vmul.f32 %v394, %v266
        %v396 = vmul.f32 %v394, %v267
        %v397 = vmul.f32 %v394, %v268
        %v398 = vmul.f32 %v394, %v269
        %v399 = vadd.f32 %v390, %v395
        %v400 = vadd.f32 %v391, %v396
        %v401 = vadd.f32 %v392, %v397
        %v402 = vadd.f32 %v393, %v398
        %v403 = vstv %s201
        %v404 = vmul.f32 %v403, %v271
        %v405 = vmul.f32 %v403, %v272
        %v406 = vmul.f32 %v403, %v273
        %v407 = vmul.f32 %v403, %v274
        %v408 = vadd.f32 %v399, %v404
        %v409 = vadd.f32 %v400, %v405
        %v410 = vadd.f32 %v401, %v406
        %v411 = vadd.f32 %v402, %v407
        %v412 = vstv %s202
        %v413 = vmul.f32 %v412, %v276
        %v414 = vmul.f32 %v412, %v277
        %v415 = vmul.f32 %v412, %v278
        %v416 = vmul.f32 %v412, %v279
        %v417 = vadd.f32 %v408, %v413
        %v418 = vadd.f32 %v409, %v414
        %v419 = vadd.f32 %v410, %v415
        %v420 = vadd.f32 %v411, %v416
        %v421 = vstv %s203
        %v422 = vmul.f32 %v421, %v281
        %v423 = vmul.f32 %v421, %v282
        %v424 = vmul.f32 %v421, %v283
        %v425 = vmul.f32 %v421, %v284
        %v426 = vadd.f32 %v417, %v422
        %v427 = vadd.f32 %v418, %v423
        %v428 = vadd.f32 %v419, %v424
        %v429 = vadd.f32 %v420, %v425
        %v430 = vmul.f32 %v426, 1.442695
        %v431 = vpow.pop %v430
        %v432 = vmul.f32 %v427, 1.442695
        %v433 = vpow.pop %v432
        %v434 = vmul.f32 %v428, 1.442695
        %v435 = vpow.pop %v434
        %v436 = vmul.f32 %v429, 1.442695
        %v437 = vpow.pop %v436
        %v438 = vstv %s257
        %v439 = vmul.f32 %v438, %v431
        %v440 = vmul.f32 %v438, %v433
        %v441 = vmul.f32 %v438, %v435
        %v442 = vmul.f32 %v438, %v437
        %v443 = vsub.f32 1.0, %v431
        %v444 = vsub.f32 1.0, %v433
        %v445 = vsub.f32 1.0, %v435
        %v446 = vsub.f32 1.0, %v437
        %v447 = vsub.f32 1.0, %v439
        %v448 = vsub.f32 1.0, %v440
        %v449 = vsub.f32 1.0, %v441
        %v450 = vsub.f32 1.0, %v442
        %v451 = vadd.f32 %v443, %v439
        %v452 = vadd.f32 %v444, %v440
        %v453 = vadd.f32 %v445, %v441
        %v454 = vadd.f32 %v446, %v442
        %v455 = vmul.f32 %v376, %v447
        %v456 = vmul.f32 %v377, %v448
        %v457 = vmul.f32 %v378, %v449
        %v458 = vmul.f32 %v379, %v450
        %v459 = vmul.f32 %v380, %v451
        %v460 = vmul.f32 %v381, %v452
        %v461 = vmul.f32 %v382, %v453
        %v462 = vmul.f32 %v383, %v454
        %v463 = vmul.f32 %v372, %v443
        %v464 = vmul.f32 %v373, %v444
        %v465 = vmul.f32 %v374, %v445
        %v466 = vmul.f32 %v375, %v446
        %v467 = vstv %s238
        %v468 = vmul.f32 %v467, %v309
        %v469 = vmul.f32 %v467, %v310
        %v470 = vmul.f32 %v467, %v311
        %v471 = vmul.f32 %v467, %v312
        %v472 = vstv %s248
        %v473 = vsub.f32 %v472, %v468
        %v474 = vsub.f32 %v472, %v469
        %v475 = vsub.f32 %v472, %v470
        %v476 = vsub.f32 %v472, %v471
        %v477 = vstv %s204
        %v478 = vmul.f32 %v477, %v266
        %v479 = vmul.f32 %v477, %v267
        %v480 = vmul.f32 %v477, %v268
        %v481 = vmul.f32 %v477, %v269
        %v482 = vadd.f32 %v473, %v478
        %v483 = vadd.f32 %v474, %v479
        %v484 = vadd.f32 %v475, %v480
        %v485 = vadd.f32 %v476, %v481
        %v486 = vstv %s205
        %v487 = vmul.f32 %v486, %v271
        %v488 = vmul.f32 %v486, %v272
        %v489 = vmul.f32 %v486, %v273
        %v490 = vmul.f32 %v486, %v274
        %v491 = vadd.f32 %v482, %v487
        %v492 = vadd.f32 %v483, %v488
        %v493 = vadd.f32 %v484, %v489
        %v494 = vadd.f32 %v485, %v490
        %v495 = vstv %s206
        %v496 = vmul.f32 %v495, %v276
        %v497 = vmul.f32 %v495, %v277
        %v498 = vmul.f32 %v495, %v278
        %v499 = vmul.f32 %v495, %v279
        %v500 = vadd.f32 %v491, %v496
        %v501 = vadd.f32 %v492, %v497
        %v502 = vadd.f32 %v493, %v498
        %v503 = vadd.f32 %v494, %v499
        %v504 = vstv %s207
        %v505 = vmul.f32 %v504, %v281
        %v506 = vmul.f32 %v504, %v282
        %v507 = vmul.f32 %v504, %v283
        %v508 = vmul.f32 %v504, %v284
        %v509 = vadd.f32 %v500, %v505
        %v510 = vadd.f32 %v501, %v506
        %v511 = vadd.f32 %v502, %v507
        %v512 = vadd.f32 %v503, %v508
        %v513 = vmul.f32 %v509, 1.442695
        %v514 = vpow.pop %v513
        %v515 = vmul.f32 %v510, 1.442695
        %v516 = vpow.pop %v515
        %v517 = vmul.f32 %v511, 1.442695
        %v518 = vpow.pop %v517
        %v519 = vmul.f32 %v512, 1.442695
        %v520 = vpow.pop %v519
        %v521 = vstv %s258
        %v522 = vmul.f32 %v521, %v514
        %v523 = vmul.f32 %v521, %v516
        %v524 = vmul.f32 %v521, %v518
        %v525 = vmul.f32 %v521, %v520
        %v526 = vsub.f32 1.0, %v514
        %v527 = vsub.f32 1.0, %v516
        %v528 = vsub.f32 1.0, %v518
        %v529 = vsub.f32 1.0, %v520
        %v530 = vsub.f32 1.0, %v522
        %v531 = vsub.f32 1.0, %v523
        %v532 = vsub.f32 1.0, %v524
        %v533 = vsub.f32 1.0, %v525
        %v534 = vadd.f32 %v526, %v522
        %v535 = vadd.f32 %v527, %v523
        %v536 = vadd.f32 %v528, %v524
        %v537 = vadd.f32 %v529, %v525
        %v538 = vmul.f32 %v455, %v530
        %v539 = vmul.f32 %v456, %v531
        %v540 = vmul.f32 %v457, %v532
        %v541 = vmul.f32 %v458, %v533
        %v542 = vmul.f32 %v459, %v534
        %v543 = vmul.f32 %v460, %v535
        %v544 = vmul.f32 %v461, %v536
        %v545 = vmul.f32 %v462, %v537
        %v546 = vmul.f32 %v463, %v526
        %v547 = vmul.f32 %v464, %v527
        %v548 = vmul.f32 %v465, %v528
        %v549 = vmul.f32 %v466, %v529
        %v550 = vstv %s239
        %v551 = vmul.f32 %v550, %v309
        %v552 = vmul.f32 %v550, %v310
        %v553 = vmul.f32 %v550, %v311
        %v554 = vmul.f32 %v550, %v312
        %v555 = vstv %s249
        %v556 = vsub.f32 %v555, %v551
        %v557 = vsub.f32 %v555, %v552
        %v558 = vsub.f32 %v555, %v553
        %v559 = vsub.f32 %v555, %v554
        %v560 = vstv %s208
        %v561 = vmul.f32 %v560, %v266
        %v562 = vmul.f32 %v560, %v267
        %v563 = vmul.f32 %v560, %v268
        %v564 = vmul.f32 %v560, %v269
        %v565 = vadd.f32 %v556, %v561
        %v566 = vadd.f32 %v557, %v562
        %v567 = vadd.f32 %v558, %v563
        %v568 = vadd.f32 %v559, %v564
        %v569 = vstv %s209
        %v570 = vmul.f32 %v569, %v271
        %v571 = vmul.f32 %v569, %v272
        %v572 = vmul.f32 %v569, %v273
        %v573 = vmul.f32 %v569, %v274
        %v574 = vadd.f32 %v565, %v570
        %v575 = vadd.f32 %v566, %v571
        %v576 = vadd.f32 %v567, %v572
        %v577 = vadd.f32 %v568, %v573
        %v578 = vstv %s210
        %v579 = vmul.f32 %v578, %v276
        %v580 = vmul.f32 %v578, %v277
        %v581 = vmul.f32 %v578, %v278
        %v582 = vmul.f32 %v578, %v279
        %v583 = vadd.f32 %v574, %v579
        %v584 = vadd.f32 %v575, %v580
        %v585 = vadd.f32 %v576, %v581
        %v586 = vadd.f32 %v577, %v582
        %v587 = vstv %s211
        %v588 = vmul.f32 %v587, %v281
        %v589 = vmul.f32 %v587, %v282
        %v590 = vmul.f32 %v587, %v283
        %v591 = vmul.f32 %v587, %v284
        %v592 = vadd.f32 %v583, %v588
        %v593 = vadd.f32 %v584, %v589
        %v594 = vadd.f32 %v585, %v590
        %v595 = vadd.f32 %v586, %v591
        %v596 = vmul.f32 %v592, 1.442695
        %v597 = vpow.pop %v596
        %v598 = vmul.f32 %v593, 1.442695
        %v599 = vpow.pop %v598
        %v600 = vmul.f32 %v594, 1.442695
        %v601 = vpow.pop %v600
        %v602 = vmul.f32 %v595, 1.442695
        %v603 = vpow.pop %v602
        %v604 = vstv %s259
        %v605 = vmul.f32 %v604, %v597
        %v606 = vmul.f32 %v604, %v599
        %v607 = vmul.f32 %v604, %v601
        %v608 = vmul.f32 %v604, %v603
        %v609 = vsub.f32 1.0, %v597
        %v610 = vsub.f32 1.0, %v599
        %v611 = vsub.f32 1.0, %v601
        %v612 = vsub.f32 1.0, %v603
        %v613 = vsub.f32 1.0, %v605
        %v614 = vsub.f32 1.0, %v606
        %v615 = vsub.f32 1.0, %v607
        %v616 = vsub.f32 1.0, %v608
        %v617 = vadd.f32 %v609, %v605
        %v618 = vadd.f32 %v610, %v606
        %v619 = vadd.f32 %v611, %v607
        %v620 = vadd.f32 %v612, %v608
        %v621 = vmul.f32 %v538, %v613
        %v622 = vmul.f32 %v539, %v614
        %v623 = vmul.f32 %v540, %v615
        %v624 = vmul.f32 %v541, %v616
        %v625 = vmul.f32 %v542, %v617
        %v626 = vmul.f32 %v543, %v618
        %v627 = vmul.f32 %v544, %v619
        %v628 = vmul.f32 %v545, %v620
        %v629 = vmul.f32 %v546, %v609
        %v630 = vmul.f32 %v547, %v610
        %v631 = vmul.f32 %v548, %v611
        %v632 = vmul.f32 %v549, %v612
        %v633 = vstv %s240
        %v634 = vmul.f32 %v633, %v309
        %v635 = vmul.f32 %v633, %v310
        %v636 = vmul.f32 %v633, %v311
        %v637 = vmul.f32 %v633, %v312
        %v638 = vstv %s250
        %v639 = vsub.f32 %v638, %v634
        %v640 = vsub.f32 %v638, %v635
        %v641 = vsub.f32 %v638, %v636
        %v642 = vsub.f32 %v638, %v637
        %v643 = vstv %s212
        %v644 = vmul.f32 %v643, %v266
        %v645 = vmul.f32 %v643, %v267
        %v646 = vmul.f32 %v643, %v268
        %v647 = vmul.f32 %v643, %v269
        %v648 = vadd.f32 %v639, %v644
        %v649 = vadd.f32 %v640, %v645
        %v650 = vadd.f32 %v641, %v646
        %v651 = vadd.f32 %v642, %v647
        %v652 = vstv %s213
        %v653 = vmul.f32 %v652, %v271
        %v654 = vmul.f32 %v652, %v272
        %v655 = vmul.f32 %v652, %v273
        %v656 = vmul.f32 %v652, %v274
        %v657 = vadd.f32 %v648, %v653
        %v658 = vadd.f32 %v649, %v654
        %v659 = vadd.f32 %v650, %v655
        %v660 = vadd.f32 %v651, %v656
        %v661 = vstv %s214
        %v662 = vmul.f32 %v661, %v276
        %v663 = vmul.f32 %v661, %v277
        %v664 = vmul.f32 %v661, %v278
        %v665 = vmul.f32 %v661, %v279
        %v666 = vadd.f32 %v657, %v662
        %v667 = vadd.f32 %v658, %v663
        %v668 = vadd.f32 %v659, %v664
        %v669 = vadd.f32 %v660, %v665
        %v670 = vstv %s215
        %v671 = vmul.f32 %v670, %v281
        %v672 = vmul.f32 %v670, %v282
        %v673 = vmul.f32 %v670, %v283
        %v674 = vmul.f32 %v670, %v284
        %v675 = vadd.f32 %v666, %v671
        %v676 = vadd.f32 %v667, %v672
        %v677 = vadd.f32 %v668, %v673
        %v678 = vadd.f32 %v669, %v674
        %v679 = vmul.f32 %v675, 1.442695
        %v680 = vpow.pop %v679
        %v681 = vmul.f32 %v676, 1.442695
        %v682 = vpow.pop %v681
        %v683 = vmul.f32 %v677, 1.442695
        %v684 = vpow.pop %v683
        %v685 = vmul.f32 %v678, 1.442695
        %v686 = vpow.pop %v685
        %v687 = vstv %s260
        %v688 = vmul.f32 %v687, %v680
        %v689 = vmul.f32 %v687, %v682
        %v690 = vmul.f32 %v687, %v684
        %v691 = vmul.f32 %v687, %v686
        %v692 = vsub.f32 1.0, %v680
        %v693 = vsub.f32 1.0, %v682
        %v694 = vsub.f32 1.0, %v684
        %v695 = vsub.f32 1.0, %v686
        %v696 = vsub.f32 1.0, %v688
        %v697 = vsub.f32 1.0, %v689
        %v698 = vsub.f32 1.0, %v690
        %v699 = vsub.f32 1.0, %v691
        %v700 = vadd.f32 %v692, %v688
        %v701 = vadd.f32 %v693, %v689
        %v702 = vadd.f32 %v694, %v690
        %v703 = vadd.f32 %v695, %v691
        %v704 = vmul.f32 %v621, %v696
        %v705 = vmul.f32 %v622, %v697
        %v706 = vmul.f32 %v623, %v698
        %v707 = vmul.f32 %v624, %v699
        %v708 = vmul.f32 %v625, %v700
        %v709 = vmul.f32 %v626, %v701
        %v710 = vmul.f32 %v627, %v702
        %v711 = vmul.f32 %v628, %v703
        %v712 = vmul.f32 %v629, %v692
        %v713 = vmul.f32 %v630, %v693
        %v714 = vmul.f32 %v631, %v694
        %v715 = vmul.f32 %v632, %v695
        %v716 = vstv %s241
        %v717 = vmul.f32 %v716, %v309
        %v718 = vmul.f32 %v716, %v310
        %v719 = vmul.f32 %v716, %v311
        %v720 = vmul.f32 %v716, %v312
        %v721 = vstv %s251
        %v722 = vsub.f32 %v721, %v717
        %v723 = vsub.f32 %v721, %v718
        %v724 = vsub.f32 %v721, %v719
        %v725 = vsub.f32 %v721, %v720
        %v726 = vstv %s216
        %v727 = vmul.f32 %v726, %v266
        %v728 = vmul.f32 %v726, %v267
        %v729 = vmul.f32 %v726, %v268
        %v730 = vmul.f32 %v726, %v269
        %v731 = vadd.f32 %v722, %v727
        %v732 = vadd.f32 %v723, %v728
        %v733 = vadd.f32 %v724, %v729
        %v734 = vadd.f32 %v725, %v730
        %v735 = vstv %s217
        %v736 = vmul.f32 %v735, %v271
        %v737 = vmul.f32 %v735, %v272
        %v738 = vmul.f32 %v735, %v273
        %v739 = vmul.f32 %v735, %v274
        %v740 = vadd.f32 %v731, %v736
        %v741 = vadd.f32 %v732, %v737
        %v742 = vadd.f32 %v733, %v738
        %v743 = vadd.f32 %v734, %v739
        %v744 = vstv %s218
        %v745 = vmul.f32 %v744, %v276
        %v746 = vmul.f32 %v744, %v277
        %v747 = vmul.f32 %v744, %v278
        %v748 = vmul.f32 %v744, %v279
        %v749 = vadd.f32 %v740, %v745
        %v750 = vadd.f32 %v741, %v746
        %v751 = vadd.f32 %v742, %v747
        %v752 = vadd.f32 %v743, %v748
        %v753 = vstv %s219
        %v754 = vmul.f32 %v753, %v281
        %v755 = vmul.f32 %v753, %v282
        %v756 = vmul.f32 %v753, %v283
        %v757 = vmul.f32 %v753, %v284
        %v758 = vadd.f32 %v749, %v754
        %v759 = vadd.f32 %v750, %v755
        %v760 = vadd.f32 %v751, %v756
        %v761 = vadd.f32 %v752, %v757
        %v762 = vmul.f32 %v758, 1.442695
        %v763 = vpow.pop %v762
        %v764 = vmul.f32 %v759, 1.442695
        %v765 = vpow.pop %v764
        %v766 = vmul.f32 %v760, 1.442695
        %v767 = vpow.pop %v766
        %v768 = vmul.f32 %v761, 1.442695
        %v769 = vpow.pop %v768
        %v770 = vstv %s261
        %v771 = vmul.f32 %v770, %v763
        %v772 = vmul.f32 %v770, %v765
        %v773 = vmul.f32 %v770, %v767
        %v774 = vmul.f32 %v770, %v769
        %v775 = vsub.f32 1.0, %v763
        %v776 = vsub.f32 1.0, %v765
        %v777 = vsub.f32 1.0, %v767
        %v778 = vsub.f32 1.0, %v769
        %v779 = vsub.f32 1.0, %v771
        %v780 = vsub.f32 1.0, %v772
        %v781 = vsub.f32 1.0, %v773
        %v782 = vsub.f32 1.0, %v774
        %v783 = vadd.f32 %v775, %v771
        %v784 = vadd.f32 %v776, %v772
        %v785 = vadd.f32 %v777, %v773
        %v786 = vadd.f32 %v778, %v774
        %v787 = vmul.f32 %v704, %v779
        %v788 = vmul.f32 %v705, %v780
        %v789 = vmul.f32 %v706, %v781
        %v790 = vmul.f32 %v707, %v782
        %v791 = vmul.f32 %v708, %v783
        %v792 = vmul.f32 %v709, %v784
        %v793 = vmul.f32 %v710, %v785
        %v794 = vmul.f32 %v711, %v786
        %v795 = vmul.f32 %v712, %v775
        %v796 = vmul.f32 %v713, %v776
        %v797 = vmul.f32 %v714, %v777
        %v798 = vmul.f32 %v715, %v778
        %v799 = vstv %s242
        %v800 = vmul.f32 %v799, %v309
        %v801 = vmul.f32 %v799, %v310
        %v802 = vmul.f32 %v799, %v311
        %v803 = vmul.f32 %v799, %v312
        %v804 = vstv %s252
        %v805 = vsub.f32 %v804, %v800
        %v806 = vsub.f32 %v804, %v801
        %v807 = vsub.f32 %v804, %v802
        %v808 = vsub.f32 %v804, %v803
        %v809 = vstv %s220
        %v810 = vmul.f32 %v809, %v266
        %v811 = vmul.f32 %v809, %v267
        %v812 = vmul.f32 %v809, %v268
        %v813 = vmul.f32 %v809, %v269
        %v814 = vadd.f32 %v805, %v810
        %v815 = vadd.f32 %v806, %v811
        %v816 = vadd.f32 %v807, %v812
        %v817 = vadd.f32 %v808, %v813
        %v818 = vstv %s221
        %v819 = vmul.f32 %v818, %v271
        %v820 = vmul.f32 %v818, %v272
        %v821 = vmul.f32 %v818, %v273
        %v822 = vmul.f32 %v818, %v274
        %v823 = vadd.f32 %v814, %v819
        %v824 = vadd.f32 %v815, %v820
        %v825 = vadd.f32 %v816, %v821
        %v826 = vadd.f32 %v817, %v822
        %v827 = vstv %s222
        %v828 = vmul.f32 %v827, %v276
        %v829 = vmul.f32 %v827, %v277
        %v830 = vmul.f32 %v827, %v278
        %v831 = vmul.f32 %v827, %v279
        %v832 = vadd.f32 %v823, %v828
        %v833 = vadd.f32 %v824, %v829
        %v834 = vadd.f32 %v825, %v830
        %v835 = vadd.f32 %v826, %v831
        %v836 = vstv %s223
        %v837 = vmul.f32 %v836, %v281
        %v838 = vmul.f32 %v836, %v282
        %v839 = vmul.f32 %v836, %v283
        %v840 = vmul.f32 %v836, %v284
        %v841 = vadd.f32 %v832, %v837
        %v842 = vadd.f32 %v833, %v838
        %v843 = vadd.f32 %v834, %v839
        %v844 = vadd.f32 %v835, %v840
        %v845 = vmul.f32 %v841, 1.442695
        %v846 = vpow.pop %v845
        %v847 = vmul.f32 %v842, 1.442695
        %v848 = vpow.pop %v847
        %v849 = vmul.f32 %v843, 1.442695
        %v850 = vpow.pop %v849
        %v851 = vmul.f32 %v844, 1.442695
        %v852 = vpow.pop %v851
        %v853 = vstv %s262
        %v854 = vmul.f32 %v853, %v846
        %v855 = vmul.f32 %v853, %v848
        %v856 = vmul.f32 %v853, %v850
        %v857 = vmul.f32 %v853, %v852
        %v858 = vsub.f32 1.0, %v846
        %v859 = vsub.f32 1.0, %v848
        %v860 = vsub.f32 1.0, %v850
        %v861 = vsub.f32 1.0, %v852
        %v862 = vsub.f32 1.0, %v854
        %v863 = vsub.f32 1.0, %v855
        %v864 = vsub.f32 1.0, %v856
        %v865 = vsub.f32 1.0, %v857
        %v866 = vadd.f32 %v858, %v854
        %v867 = vadd.f32 %v859, %v855
        %v868 = vadd.f32 %v860, %v856
        %v869 = vadd.f32 %v861, %v857
        %v870 = vmul.f32 %v787, %v862
        %v871 = vmul.f32 %v788, %v863
        %v872 = vmul.f32 %v789, %v864
        %v873 = vmul.f32 %v790, %v865
        %v874 = vmul.f32 %v791, %v866
        %v875 = vmul.f32 %v792, %v867
        %v876 = vmul.f32 %v793, %v868
        %v877 = vmul.f32 %v794, %v869
        %v878 = vmul.f32 %v795, %v858
        %v879 = vmul.f32 %v796, %v859
        %v880 = vmul.f32 %v797, %v860
        %v881 = vmul.f32 %v798, %v861
        %v882 = vstv %s243
        %v883 = vmul.f32 %v882, %v309
        %v884 = vmul.f32 %v882, %v310
        %v885 = vmul.f32 %v882, %v311
        %v886 = vmul.f32 %v882, %v312
        %v887 = vstv %s253
        %v888 = vsub.f32 %v887, %v883
        %v889 = vsub.f32 %v887, %v884
        %v890 = vsub.f32 %v887, %v885
        %v891 = vsub.f32 %v887, %v886
        %v892 = vstv %s224
        %v893 = vmul.f32 %v892, %v266
        %v894 = vmul.f32 %v892, %v267
        %v895 = vmul.f32 %v892, %v268
        %v896 = vmul.f32 %v892, %v269
        %v897 = vadd.f32 %v888, %v893
        %v898 = vadd.f32 %v889, %v894
        %v899 = vadd.f32 %v890, %v895
        %v900 = vadd.f32 %v891, %v896
        %v901 = vstv %s225
        %v902 = vmul.f32 %v901, %v271
        %v903 = vmul.f32 %v901, %v272
        %v904 = vmul.f32 %v901, %v273
        %v905 = vmul.f32 %v901, %v274
        %v906 = vadd.f32 %v897, %v902
        %v907 = vadd.f32 %v898, %v903
        %v908 = vadd.f32 %v899, %v904
        %v909 = vadd.f32 %v900, %v905
        %v910 = vstv %s226
        %v911 = vmul.f32 %v910, %v276
        %v912 = vmul.f32 %v910, %v277
        %v913 = vmul.f32 %v910, %v278
        %v914 = vmul.f32 %v910, %v279
        %v915 = vadd.f32 %v906, %v911
        %v916 = vadd.f32 %v907, %v912
        %v917 = vadd.f32 %v908, %v913
        %v918 = vadd.f32 %v909, %v914
        %v919 = vstv %s227
        %v920 = vmul.f32 %v919, %v281
        %v921 = vmul.f32 %v919, %v282
        %v922 = vmul.f32 %v919, %v283
        %v923 = vmul.f32 %v919, %v284
        %v924 = vadd.f32 %v915, %v920
        %v925 = vadd.f32 %v916, %v921
        %v926 = vadd.f32 %v917, %v922
        %v927 = vadd.f32 %v918, %v923
        %v928 = vmul.f32 %v924, 1.442695
        %v929 = vpow.pop %v928
        %v930 = vmul.f32 %v925, 1.442695
        %v931 = vpow.pop %v930
        %v932 = vmul.f32 %v926, 1.442695
        %v933 = vpow.pop %v932
        %v934 = vmul.f32 %v927, 1.442695
        %v935 = vpow.pop %v934
        %v936 = vstv %s263
        %v937 = vmul.f32 %v936, %v929
        %v938 = vmul.f32 %v936, %v931
        %v939 = vmul.f32 %v936, %v933
        %v940 = vmul.f32 %v936, %v935
        %v941 = vsub.f32 1.0, %v929
        %v942 = vsub.f32 1.0, %v931
        %v943 = vsub.f32 1.0, %v933
        %v944 = vsub.f32 1.0, %v935
        %v945 = vsub.f32 1.0, %v937
        %v946 = vsub.f32 1.0, %v938
        %v947 = vsub.f32 1.0, %v939
        %v948 = vsub.f32 1.0, %v940
        %v949 = vadd.f32 %v941, %v937
        %v950 = vadd.f32 %v942, %v938
        %v951 = vadd.f32 %v943, %v939
        %v952 = vadd.f32 %v944, %v940
        %v953 = vmul.f32 %v870, %v945
        %v954 = vmul.f32 %v871, %v946
        %v955 = vmul.f32 %v872, %v947
        %v956 = vmul.f32 %v873, %v948
        %v957 = vmul.f32 %v874, %v949
        %v958 = vmul.f32 %v875, %v950
        %v959 = vmul.f32 %v876, %v951
        %v960 = vmul.f32 %v877, %v952
        %v961 = vmul.f32 %v878, %v941
        %v962 = vmul.f32 %v879, %v942
        %v963 = vmul.f32 %v880, %v943
        %v964 = vmul.f32 %v881, %v944
        %v965 = vstv %s244
        %v966 = vmul.f32 %v965, %v309
        %v967 = vmul.f32 %v965, %v310
        %v968 = vmul.f32 %v965, %v311
        %v969 = vmul.f32 %v965, %v312
        %v970 = vstv %s254
        %v971 = vsub.f32 %v970, %v966
        %v972 = vsub.f32 %v970, %v967
        %v973 = vsub.f32 %v970, %v968
        %v974 = vsub.f32 %v970, %v969
        %v975 = vstv %s228
        %v976 = vmul.f32 %v975, %v266
        %v977 = vmul.f32 %v975, %v267
        %v978 = vmul.f32 %v975, %v268
        %v979 = vmul.f32 %v975, %v269
        %v980 = vadd.f32 %v971, %v976
        %v981 = vadd.f32 %v972, %v977
        %v982 = vadd.f32 %v973, %v978
        %v983 = vadd.f32 %v974, %v979
        %v984 = vstv %s229
        %v985 = vmul.f32 %v984, %v271
        %v986 = vmul.f32 %v984, %v272
        %v987 = vmul.f32 %v984, %v273
        %v988 = vmul.f32 %v984, %v274
        %v989 = vadd.f32 %v980, %v985
        %v990 = vadd.f32 %v981, %v986
        %v991 = vadd.f32 %v982, %v987
        %v992 = vadd.f32 %v983, %v988
        %v993 = vstv %s230
        %v994 = vmul.f32 %v993, %v276
        %v995 = vmul.f32 %v993, %v277
        %v996 = vmul.f32 %v993, %v278
        %v997 = vmul.f32 %v993, %v279
        %v998 = vadd.f32 %v989, %v994
        %v999 = vadd.f32 %v990, %v995
        %v1000 = vadd.f32 %v991, %v996
        %v1001 = vadd.f32 %v992, %v997
        %v1002 = vstv %s231
        %v1003 = vmul.f32 %v1002, %v281
        %v1004 = vmul.f32 %v1002, %v282
        %v1005 = vmul.f32 %v1002, %v283
        %v1006 = vmul.f32 %v1002, %v284
        %v1007 = vadd.f32 %v998, %v1003
        %v1008 = vadd.f32 %v999, %v1004
        %v1009 = vadd.f32 %v1000, %v1005
        %v1010 = vadd.f32 %v1001, %v1006
        %v1011 = vmul.f32 %v1007, 1.442695
        %v1012 = vpow.pop %v1011
        %v1013 = vmul.f32 %v1008, 1.442695
        %v1014 = vpow.pop %v1013
        %v1015 = vmul.f32 %v1009, 1.442695
        %v1016 = vpow.pop %v1015
        %v1017 = vmul.f32 %v1010, 1.442695
        %v1018 = vpow.pop %v1017
        %v1019 = vstv %s264
        %v1020 = vmul.f32 %v1019, %v1012
        %v1021 = vmul.f32 %v1019, %v1014
        %v1022 = vmul.f32 %v1019, %v1016
        %v1023 = vmul.f32 %v1019, %v1018
        %v1024 = vsub.f32 1.0, %v1012
        %v1025 = vsub.f32 1.0, %v1014
        %v1026 = vsub.f32 1.0, %v1016
        %v1027 = vsub.f32 1.0, %v1018
        %v1028 = vsub.f32 1.0, %v1020
        %v1029 = vsub.f32 1.0, %v1021
        %v1030 = vsub.f32 1.0, %v1022
        %v1031 = vsub.f32 1.0, %v1023
        %v1032 = vadd.f32 %v1024, %v1020
        %v1033 = vadd.f32 %v1025, %v1021
        %v1034 = vadd.f32 %v1026, %v1022
        %v1035 = vadd.f32 %v1027, %v1023
        %v1036 = vmul.f32 %v953, %v1028
        %v1037 = vmul.f32 %v954, %v1029
        %v1038 = vmul.f32 %v955, %v1030
        %v1039 = vmul.f32 %v956, %v1031
        %v1040 = vmul.f32 %v957, %v1032
        %v1041 = vmul.f32 %v958, %v1033
        %v1042 = vmul.f32 %v959, %v1034
        %v1043 = vmul.f32 %v960, %v1035
        %v1044 = vmul.f32 %v961, %v1024
        %v1045 = vmul.f32 %v962, %v1025
        %v1046 = vmul.f32 %v963, %v1026
        %v1047 = vmul.f32 %v964, %v1027
        %v1048 = vstv %s245
        %v1049 = vmul.f32 %v1048, %v309
        %v1050 = vmul.f32 %v1048, %v310
        %v1051 = vmul.f32 %v1048, %v311
        %v1052 = vmul.f32 %v1048, %v312
        %v1053 = vstv %s255
        %v1054 = vsub.f32 %v1053, %v1049
        %v1055 = vsub.f32 %v1053, %v1050
        %v1056 = vsub.f32 %v1053, %v1051
        %v1057 = vsub.f32 %v1053, %v1052
        %v1058 = vstv %s232
        %v1059 = vmul.f32 %v1058, %v266
        %v1060 = vmul.f32 %v1058, %v267
        %v1061 = vmul.f32 %v1058, %v268
        %v1062 = vmul.f32 %v1058, %v269
        %v1063 = vadd.f32 %v1054, %v1059
        %v1064 = vadd.f32 %v1055, %v1060
        %v1065 = vadd.f32 %v1056, %v1061
        %v1066 = vadd.f32 %v1057, %v1062
        %v1067 = vstv %s233
        %v1068 = vmul.f32 %v1067, %v271
        %v1069 = vmul.f32 %v1067, %v272
        %v1070 = vmul.f32 %v1067, %v273
        %v1071 = vmul.f32 %v1067, %v274
        %v1072 = vadd.f32 %v1063, %v1068
        %v1073 = vadd.f32 %v1064, %v1069
        %v1074 = vadd.f32 %v1065, %v1070
        %v1075 = vadd.f32 %v1066, %v1071
        %v1076 = vstv %s234
        %v1077 = vmul.f32 %v1076, %v276
        %v1078 = vmul.f32 %v1076, %v277
        %v1079 = vmul.f32 %v1076, %v278
        %v1080 = vmul.f32 %v1076, %v279
        %v1081 = vadd.f32 %v1072, %v1077
        %v1082 = vadd.f32 %v1073, %v1078
        %v1083 = vadd.f32 %v1074, %v1079
        %v1084 = vadd.f32 %v1075, %v1080
        %v1085 = vstv %s235
        %v1086 = vmul.f32 %v1085, %v281
        %v1087 = vmul.f32 %v1085, %v282
        %v1088 = vmul.f32 %v1085, %v283
        %v1089 = vmul.f32 %v1085, %v284
        %v1090 = vadd.f32 %v1081, %v1086
        %v1091 = vadd.f32 %v1082, %v1087
        %v1092 = vadd.f32 %v1083, %v1088
        %v1093 = vadd.f32 %v1084, %v1089
        %v1094 = vmul.f32 %v1090, 1.442695
        %v1095 = vpow.pop %v1094
        %v1096 = vmul.f32 %v1091, 1.442695
        %v1097 = vpow.pop %v1096
        %v1098 = vmul.f32 %v1092, 1.442695
        %v1099 = vpow.pop %v1098
        %v1100 = vmul.f32 %v1093, 1.442695
        %v1101 = vpow.pop %v1100
        %v1102 = vstv %s265
        %v1103 = vmul.f32 %v1102, %v1095
        %v1104 = vmul.f32 %v1102, %v1097
        %v1105 = vmul.f32 %v1102, %v1099
        %v1106 = vmul.f32 %v1102, %v1101
        %v1107 = vsub.f32 1.0, %v1095
        %v1108 = vsub.f32 1.0, %v1097
        %v1109 = vsub.f32 1.0, %v1099
        %v1110 = vsub.f32 1.0, %v1101
        %v1111 = vsub.f32 1.0, %v1103
        %v1112 = vsub.f32 1.0, %v1104
        %v1113 = vsub.f32 1.0, %v1105
        %v1114 = vsub.f32 1.0, %v1106
        %v1115 = vadd.f32 %v1107, %v1103
        %v1116 = vadd.f32 %v1108, %v1104
        %v1117 = vadd.f32 %v1109, %v1105
        %v1118 = vadd.f32 %v1110, %v1106
        %v1119 = vmul.f32 %v1036, %v1111
        %v1120 = vmul.f32 %v1037, %v1112
        %v1121 = vmul.f32 %v1038, %v1113
        %v1122 = vmul.f32 %v1039, %v1114
        %v1123 = vmul.f32 %v1040, %v1115
        %v1124 = vmul.f32 %v1041, %v1116
        %v1125 = vmul.f32 %v1042, %v1117
        %v1126 = vmul.f32 %v1043, %v1118
        %v1127 = vmul.f32 %v1044, %v1107
        %v1128 = vmul.f32 %v1045, %v1108
        %v1129 = vmul.f32 %v1046, %v1109
        %v1130 = vmul.f32 %v1047, %v1110
        %v1131 = vsub.f32 %v1119, %v1127
        %v1132 = vsub.f32 %v1120, %v1128
        %v1133 = vsub.f32 %v1121, %v1129
        %v1134 = vsub.f32 %v1122, %v1130
        %v1135 = vsub.f32 %v1123, %v1127
        %v1136 = vsub.f32 %v1124, %v1128
        %v1137 = vsub.f32 %v1125, %v1129
        %v1138 = vsub.f32 %v1126, %v1130
        %v1139 = vadd.f32 %v1119, %v1135
        %v1140 = vadd.f32 %v1120, %v1136
        %v1141 = vadd.f32 %v1121, %v1137
        %v1142 = vadd.f32 %v1122, %v1138
        %v1143 = vrcp.pop %v1139
        %v1144 = vmul.f32 1.0, %v1143
        %v1145 = vrcp.pop %v1140
        %v1146 = vmul.f32 1.0, %v1145
        %v1147 = vrcp.pop %v1141
        %v1148 = vmul.f32 1.0, %v1147
        %v1149 = vrcp.pop %v1142
        %v1150 = vmul.f32 1.0, %v1149
        %v1151 = vmul.f32 %v1131, %v1144
        %v1152 = vmul.f32 %v1132, %v1146
        %v1153 = vmul.f32 %v1133, %v1148
        %v1154 = vmul.f32 %v1134, %v1150
        %1155 = vst [vmem:[%s195] sm:$0xff] %v1151
        %1156 = vst [vmem:[%s195 + $0x8] sm:$0xff] %v1152
        %1157 = vst [vmem:[%s195 + $0x10] sm:$0xff] %v1153
        %1158 = vst [vmem:[%s195 + $0x18] sm:$0xff] %v1154
        %v1159 = vmul.f32 %v1135, %v1144
        %v1160 = vmul.f32 %v1136, %v1146
        %v1161 = vmul.f32 %v1137, %v1148
        %v1162 = vmul.f32 %v1138, %v1150
        %s1163 = scalar_lea.vmem %s195, 32
        %1164 = vst [vmem:[%s1163] sm:$0xff] %v1159
        %1165 = vst [vmem:[%s1163 + $0x8] sm:$0xff] %v1160
        %1166 = vst [vmem:[%s1163 + $0x10] sm:$0xff] %v1161
        %1167 = vst [vmem:[%s1163 + $0x18] sm:$0xff] %v1162
        %v1168 = vmul.f32 %v1127, %v1144
        %v1169 = vmul.f32 %v1128, %v1146
        %v1170 = vmul.f32 %v1129, %v1148
        %v1171 = vmul.f32 %v1130, %v1150
        %s1172 = scalar_lea.vmem %s195, 64
        %1173 = vst [vmem:[%s1172] sm:$0xff] %v1168
        %1174 = vst [vmem:[%s1172 + $0x8] sm:$0xff] %v1169
        %1175 = vst [vmem:[%s1172 + $0x10] sm:$0xff] %v1170
        %1176 = vst [vmem:[%s1172 + $0x18] sm:$0xff] %v1171
        %p1177 = scmp.lt.s32.totalorder %s18, 1
        %s1178 = scalar_select %p1177, %s18, 1
        %p1179 = scmp.lt.s32.totalorder %s19, 0
        %s1180 = scalar_select %p1179, %s19, 0
        %s1181 = smul.addr %s1180, 4
        %s1182 = smul.addr %s1178, 12
        %s1183 = sadd.s32 %s1181, %s1182
        %s1184 = smul.addr %s1183, 8
        %s1185 = scalar_lea.vmem %s2, %s1184
        // Predicated region
        $region33: #{ds1_forward.1} parent=27 // pred_check
          %p1186 = pneg %p95
        $region34: #{ds1_forward.1} parent=27 // pred_check_branch
          %1188 = sbr.rel (%p1186) target = $region36
        $region35: #{ds1_forward.1} parent=27 // pred_region
          _
        $region36: #{ds1_forward.1} parent=27 // pred_fallthru
          _
      $region28: #{ds1_forward.1} parent=5 // pred_fallthru
        _
      %p1189 = scmp.le.s32.totalorder 2, %s9
      // Predicated region
      $region37: #{ds1_forward.1} parent=5 // pred_check
        %p1190 = pneg %p1189
      $region38: #{ds1_forward.1} parent=5 // pred_check_branch
        %1192 = sbr.rel (%p1190) target = $region40
      $region39: #{ds1_forward.1} parent=5 // pred_region
        %s1193 = ssub.s32 %s9, 2
        // Predicated region
        $region41: #{ds1_forward.1} parent=39 // pred_check
          %p1194 = pneg %p101
        $region42: #{ds1_forward.1} parent=39 // pred_check_branch
          %1196 = sbr.rel (%p1194) target = $region44
        $region43: #{ds1_forward.1} parent=39 // pred_region
          %p1197 = scmp.lt.s32.totalorder %s20, 1
          %s1198 = scalar_select %p1197, %s20, 1
          %p1199 = scmp.lt.s32.totalorder %s21, 0
          %s1200 = scalar_select %p1199, %s21, 0
          %s1201 = smul.addr %s1200, 4
          %s1202 = smul.addr %s1198, 12
          %s1203 = sadd.s32 %s1201, %s1202
          %s1204 = smul.addr %s1203, 8
          %s1205 = scalar_lea.vmem %s2, %s1204
        $region44: #{ds1_forward.1} parent=39 // pred_fallthru
          _
      $region40: #{ds1_forward.1} parent=5 // pred_fallthru
        _
    $region6: #{ds1_forward.1} parent=1 // loop_footer
      %s13 = sadd.s32 1, %s9
    $region7: #{ds1_forward.1} parent=1 // loop_footer_branch
      %8 = sbr.rel target = $region3
    $region8: #{ds1_forward.1} parent=1 // loop_exit
      _
    %1206 = vsyncpa [#allocation3], 1
    %s1207 = scalar_lea.sflag [#allocation3], 1
    %1208 = vsyncpa %s1207, 1

</llo_original>
